<compile_context>
chip_gen: v5e
topology: v5e:2x2
jax: 0.10.0
libtpu: 0.0.40
codegen_flags: <defaults>
</compile_context>

<pallas_src>
import jax
import jax.numpy as jnp
from jax import lax
from jax.experimental import pallas as pl
from jax.experimental.pallas import tpu as pltpu

HIDDEN = 64
INPUT_SIZE = 1
NUM_LAYERS = 2  # hard-coded as two explicit (pipelined) layers inside the kernel


def _lstm_kernel(add_ref,    # (T+1, B, 8H) f32  pre-scaled additive gate terms
                 wrec_ref,   # (2H, 8H)     f32  fused recurrent/input weights
                 wfc_ref,    # (1, H)       f32  fc weight
                 bfc_ref,    # (1, 1)       f32  fc bias
                 out_ref):   # (B, 1)       f32
    n_iter, B, GG = add_ref.shape          # GG = 8H
    H = GG // 8
    P = 2 * H                              # packed width of one gate slab (both layers)

    # Hoist the weight load out of the unrolled recurrence.
    w_rec = wrec_ref[...]                  # (2H, 8H) f32

    def step(k, carry):
        # h = [h0(k-1) | h1(k-2)], c = [c0(k-1) | c1(k-2)]   (B, 2H) f32
        h, c = carry
        # Single fused matmul (both layers' recurrence + layer-1 input path);
        # depends only on previous-iteration state -> issued at top of step.
        rec = jnp.dot(h, w_rec, preferred_element_type=jnp.float32)   # (B, 8H)
        gates = rec + add_ref[k]           # i/f/o columns pre-scaled by 0.5
        t = jnp.tanh(gates)                # one EUP pass over the 4-vreg slab
        if_sig = 0.5 * (t[:, :2 * P] + 1.0)   # sigmoid via tanh identity (VPU)
        i_g = if_sig[:, :P]                # [i0 | i1]
        f_g = if_sig[:, P:]                # [f0 | f1]
        g_g = t[:, 2 * P:3 * P]            # [g0 | g1]
        o_g = 0.5 * (t[:, 3 * P:] + 1.0)   # [o0 | o1]
        c_new = f_g * c + i_g * g_g        # [c0(k)  | c1(k-1)]  -- no lane concat
        h_new = o_g * jnp.tanh(c_new)      # [h0(k)  | h1(k-1)]  -- feeds next matmul
        return h_new, c_new

    zeros = jnp.zeros((B, P), jnp.float32)
    h, _ = lax.fori_loop(0, n_iter, step, (zeros, zeros), unroll=True)

    # fc on the top-layer hidden state of the last real step: h1(T-1) = h[:, H:]
    h1 = h[:, H:]
    out = jnp.sum(h1 * wfc_ref[...], axis=-1, keepdims=True) + bfc_ref[...]
    out_ref[...] = out.astype(out_ref.dtype)


def lstm_model_forward(x, params):
    """x: (B, T, I) float32 (batch_first, like the PyTorch module)."""
    B, T, I = x.shape
    assert I == INPUT_SIZE, "kernel assumes input_size == 1"
    H = HIDDEN
    G = 4 * H
    f32 = jnp.float32

    def interleave_gates(a0, a1):
        """Interleave two (..., 4H) gate tensors (PyTorch order [i,f,g,o]) into
        the packed (..., 8H) layout [i0 i1 f0 f1 g0 g1 o0 o1] (each H wide)."""
        lead = a0.shape[:-1]
        a0r = a0.reshape(lead + (4, 1, H))
        a1r = a1.reshape(lead + (4, 1, H))
        return jnp.concatenate([a0r, a1r], axis=-2).reshape(lead + (8 * H,))

    # sigmoid(x) = 0.5*(tanh(x/2)+1): pre-scale ALL i/f/o gate contributions by
    # 0.5 (g columns untouched).  Applied to w_rec AND add_all below.
    col_scale = jnp.concatenate(
        [jnp.full((4 * H,), 0.5, f32),      # i0 i1 f0 f1
         jnp.ones((2 * H,), f32),           # g0 g1
         jnp.full((2 * H,), 0.5, f32)])     # o0 o1

    # --- fused recurrent / layer-1-input weight block (2H, 8H) ---------------
    whh0_t = params["weight_hh_l0"].T.astype(f32)            # (H, 4H)
    whh1_t = params["weight_hh_l1"].T.astype(f32)            # (H, 4H)
    wih1_t = params["weight_ih_l1"].T.astype(f32)            # (H, 4H)
    top = interleave_gates(whh0_t, wih1_t)                    # rows driven by h0
    bot = interleave_gates(jnp.zeros((H, G), f32), whh1_t)    # rows driven by h1
    w_rec = jnp.concatenate([top, bot], axis=0) * col_scale   # (2H, 8H)

    # --- per-step additive gate terms (T+1, B, 8H) ----------------------------
    # Layer-0 columns: x @ W_ih0^T + (b_ih0 + b_hh0) for t < T (precomputed off
    # the recurrent path); zeros for the extra epilogue iteration t = T.
    wih0 = params["weight_ih_l0"].astype(f32)                       # (4H, I)
    b0 = (params["bias_ih_l0"] + params["bias_hh_l0"]).astype(f32)  # (4H,)
    x_tm = jnp.transpose(x, (1, 0, 2)).astype(f32)                  # (T, B, I)
    ih0_all = jnp.einsum("tbi,gi->tbg", x_tm, wih0) + b0            # (T, B, 4H)
    ih0_ext = jnp.concatenate([ih0_all, jnp.zeros((1, B, G), f32)], axis=0)

    # Layer-1 columns: combined bias; zero its g column at t=0 so the pipelined
    # "layer-1 step -1" in the prologue iteration is an exact no-op (h1,c1 stay 0).
    b1 = (params["bias_ih_l1"] + params["bias_hh_l1"]).astype(f32)  # (4H,)
    b1_t0 = b1.at[2 * H:3 * H].set(0.0)
    b1_all = jnp.concatenate(
        [b1_t0[None, None, :], jnp.broadcast_to(b1, (T, 1, G))], axis=0)
    b1_all = jnp.broadcast_to(b1_all, (T + 1, B, G))

    add_all = interleave_gates(ih0_ext, b1_all) * col_scale         # (T+1, B, 8H)

    wfc = params["fc_weight"].astype(f32)                           # (1, H)
    bfc = params["fc_bias"].astype(f32).reshape(1, 1)               # (1, 1)

    vmem = pl.BlockSpec(memory_space=pltpu.MemorySpace.VMEM)
    return pl.pallas_call(
        _lstm_kernel,
        out_shape=jax.ShapeDtypeStruct((B, 1), f32),
        in_specs=[vmem] * 4,
        out_specs=vmem,
    )(add_all, w_rec, wfc, bfc)


def _reference_forward(x, params):
    """Pure-JAX f32 reference (same math as the PyTorch module)."""
    B, T, I = x.shape
    H = HIDDEN

    def cell(x_t, h, c, w_ih, w_hh, b_ih, b_hh):
        gates = x_t @ w_ih.T + b_ih + h @ w_hh.T + b_hh
        i = jax.nn.sigmoid(gates[:, 0 * H:1 * H])
        f = jax.nn.sigmoid(gates[:, 1 * H:2 * H])
        g = jnp.tanh(gates[:, 2 * H:3 * H])
        o = jax.nn.sigmoid(gates[:, 3 * H:4 * H])
        c_new = f * c + i * g
        return o * jnp.tanh(c_new), c_new

    h0 = c0 = h1 = c1 = jnp.zeros((B, H), jnp.float32)
    for t in range(T):
        h0, c0 = cell(x[:, t, :], h0, c0, params["weight_ih_l0"],
                      params["weight_hh_l0"], params["bias_ih_l0"],
                      params["bias_hh_l0"])
        h1, c1 = cell(h0, h1, c1, params["weight_ih_l1"],
                      params["weight_hh_l1"], params["bias_ih_l1"],
                      params["bias_hh_l1"])
    return h1 @ params["fc_weight"].T + params["fc_bias"]


def init_params(key, hidden=HIDDEN, input_size=INPUT_SIZE):
    """Deterministic init mimicking PyTorch's U(-1/sqrt(H), 1/sqrt(H))."""
    k = 1.0 / jnp.sqrt(hidden)
    keys = jax.random.split(key, 10)
    u = lambda kk, shape: jax.random.uniform(kk, shape, jnp.float32, -k, k)
    return {
        "weight_ih_l0": u(keys[0], (4 * hidden, input_size)),
        "weight_hh_l0": u(keys[1], (4 * hidden, hidden)),
        "bias_ih_l0":   u(keys[2], (4 * hidden,)),
        "bias_hh_l0":   u(keys[3], (4 * hidden,)),
        "weight_ih_l1": u(keys[4], (4 * hidden, hidden)),
        "weight_hh_l1": u(keys[5], (4 * hidden, hidden)),
        "bias_ih_l1":   u(keys[6], (4 * hidden,)),
        "bias_hh_l1":   u(keys[7], (4 * hidden,)),
        "fc_weight":    u(keys[8], (1, hidden)),
        "fc_bias":      u(keys[9], (1,)),
    }


if __name__ == "__main__":
    key = jax.random.PRNGKey(0)
    k_x, k_p = jax.random.split(key)

    B, T, I = 2, 8, INPUT_SIZE
    x = jax.random.normal(k_x, (B, T, I), jnp.float32)
    params = init_params(k_p)

    out = lstm_model_forward(x, params)
    out = jax.block_until_ready(out)

    ref = _reference_forward(x, params)
    assert out.shape == (B, 1)
    # f32 state/weights throughout; tolerance covers possible reduced-precision
    # MXU passes and the tanh-identity sigmoid formulation.
    assert jnp.allclose(out, ref, atol=2e-2, rtol=2e-2), (out, ref)

    print("KERNEL_OK")
</pallas_src>

<mosaic_0001>
module attributes {stable_mosaic.version = 11 : i64} {
  func.func @_lstm_kernel(%arg0: memref<9x2x512xf32, #tpu.memory_space<vmem>>, %arg1: memref<128x512xf32, #tpu.memory_space<vmem>>, %arg2: memref<1x64xf32, #tpu.memory_space<vmem>>, %arg3: memref<1x1xf32, #tpu.memory_space<vmem>>, %arg4: memref<2x1xf32, #tpu.memory_space<vmem>>) attributes {dimension_semantics = [], scalar_prefetch = 0 : i64, scratch_operands = 0 : i64, tpu.core_type = #tpu.core_type<tc>} {
    %c0 = arith.constant 0 : index
    %c0_0 = arith.constant 0 : index
    %0 = vector.load %arg1[%c0, %c0_0] : memref<128x512xf32, #tpu.memory_space<vmem>>, vector<128x512xf32>
    %cst = arith.constant 0.000000e+00 : f32
    %1 = vector.broadcast %cst : f32 to vector<2x128xf32>
    %c0_i32 = arith.constant 0 : i32
    %cst_1 = arith.constant dense<0.000000e+00> : vector<2x512xf32>
    %2 = tpu.matmul %1, %0, %cst_1 {dimension_numbers = #tpu.dot_dimension_numbers<[1], [0], [0], [1], [0, 0, 1, 1], [], []>} : vector<2x128xf32>, vector<128x512xf32>, vector<2x512xf32> -> vector<2x512xf32>
    %3 = arith.index_cast %c0_i32 : i32 to index
    %c0_2 = arith.constant 0 : index
    %c0_3 = arith.constant 0 : index
    %4 = vector.load %arg0[%3, %c0_2, %c0_3] : memref<9x2x512xf32, #tpu.memory_space<vmem>>, vector<1x2x512xf32>
    %5 = vector.shape_cast %4 : vector<1x2x512xf32> to vector<2x512xf32>
    %6 = arith.addf %2, %5 : vector<2x512xf32>
    %7 = math.tanh %6 : vector<2x512xf32>
    %8 = vector.extract_strided_slice %7 {offsets = [0, 0], sizes = [2, 256], strides = [1, 1]} : vector<2x512xf32> to vector<2x256xf32>
    %cst_4 = arith.constant 1.000000e+00 : f32
    %9 = vector.broadcast %cst_4 : f32 to vector<2x256xf32>
    %10 = arith.addf %8, %9 : vector<2x256xf32>
    %cst_5 = arith.constant 5.000000e-01 : f32
    %11 = vector.broadcast %cst_5 : f32 to vector<2x256xf32>
    %12 = arith.mulf %11, %10 : vector<2x256xf32>
    %13 = vector.extract_strided_slice %12 {offsets = [0, 0], sizes = [2, 128], strides = [1, 1]} : vector<2x256xf32> to vector<2x128xf32>
    %14 = vector.extract_strided_slice %12 {offsets = [0, 128], sizes = [2, 128], strides = [1, 1]} : vector<2x256xf32> to vector<2x128xf32>
    %15 = vector.extract_strided_slice %7 {offsets = [0, 256], sizes = [2, 128], strides = [1, 1]} : vector<2x512xf32> to vector<2x128xf32>
    %16 = vector.extract_strided_slice %7 {offsets = [0, 384], sizes = [2, 128], strides = [1, 1]} : vector<2x512xf32> to vector<2x128xf32>
    %cst_6 = arith.constant 1.000000e+00 : f32
    %17 = vector.broadcast %cst_6 : f32 to vector<2x128xf32>
    %18 = arith.addf %16, %17 : vector<2x128xf32>
    %cst_7 = arith.constant 5.000000e-01 : f32
    %19 = vector.broadcast %cst_7 : f32 to vector<2x128xf32>
    %20 = arith.mulf %19, %18 : vector<2x128xf32>
    %21 = arith.mulf %14, %1 : vector<2x128xf32>
    %22 = arith.mulf %13, %15 : vector<2x128xf32>
    %23 = arith.addf %21, %22 : vector<2x128xf32>
    %24 = math.tanh %23 : vector<2x128xf32>
    %25 = arith.mulf %20, %24 : vector<2x128xf32>
    %c1_i32 = arith.constant 1 : i32
    %cst_8 = arith.constant dense<0.000000e+00> : vector<2x512xf32>
    %26 = tpu.matmul %25, %0, %cst_8 {dimension_numbers = #tpu.dot_dimension_numbers<[1], [0], [0], [1], [0, 0, 1, 1], [], []>} : vector<2x128xf32>, vector<128x512xf32>, vector<2x512xf32> -> vector<2x512xf32>
    %27 = arith.index_cast %c1_i32 : i32 to index
    %c0_9 = arith.constant 0 : index
    %c0_10 = arith.constant 0 : index
    %28 = vector.load %arg0[%27, %c0_9, %c0_10] : memref<9x2x512xf32, #tpu.memory_space<vmem>>, vector<1x2x512xf32>
    %29 = vector.shape_cast %28 : vector<1x2x512xf32> to vector<2x512xf32>
    %30 = arith.addf %26, %29 : vector<2x512xf32>
    %31 = math.tanh %30 : vector<2x512xf32>
    %32 = vector.extract_strided_slice %31 {offsets = [0, 0], sizes = [2, 256], strides = [1, 1]} : vector<2x512xf32> to vector<2x256xf32>
    %cst_11 = arith.constant 1.000000e+00 : f32
    %33 = vector.broadcast %cst_11 : f32 to vector<2x256xf32>
    %34 = arith.addf %32, %33 : vector<2x256xf32>
    %cst_12 = arith.constant 5.000000e-01 : f32
    %35 = vector.broadcast %cst_12 : f32 to vector<2x256xf32>
    %36 = arith.mulf %35, %34 : vector<2x256xf32>
    %37 = vector.extract_strided_slice %36 {offsets = [0, 0], sizes = [2, 128], strides = [1, 1]} : vector<2x256xf32> to vector<2x128xf32>
    %38 = vector.extract_strided_slice %36 {offsets = [0, 128], sizes = [2, 128], strides = [1, 1]} : vector<2x256xf32> to vector<2x128xf32>
    %39 = vector.extract_strided_slice %31 {offsets = [0, 256], sizes = [2, 128], strides = [1, 1]} : vector<2x512xf32> to vector<2x128xf32>
    %40 = vector.extract_strided_slice %31 {offsets = [0, 384], sizes = [2, 128], strides = [1, 1]} : vector<2x512xf32> to vector<2x128xf32>
    %cst_13 = arith.constant 1.000000e+00 : f32
    %41 = vector.broadcast %cst_13 : f32 to vector<2x128xf32>
    %42 = arith.addf %40, %41 : vector<2x128xf32>
    %cst_14 = arith.constant 5.000000e-01 : f32
    %43 = vector.broadcast %cst_14 : f32 to vector<2x128xf32>
    %44 = arith.mulf %43, %42 : vector<2x128xf32>
    %45 = arith.mulf %38, %23 : vector<2x128xf32>
    %46 = arith.mulf %37, %39 : vector<2x128xf32>
    %47 = arith.addf %45, %46 : vector<2x128xf32>
    %48 = math.tanh %47 : vector<2x128xf32>
    %49 = arith.mulf %44, %48 : vector<2x128xf32>
    %c2_i32 = arith.constant 2 : i32
    %cst_15 = arith.constant dense<0.000000e+00> : vector<2x512xf32>
    %50 = tpu.matmul %49, %0, %cst_15 {dimension_numbers = #tpu.dot_dimension_numbers<[1], [0], [0], [1], [0, 0, 1, 1], [], []>} : vector<2x128xf32>, vector<128x512xf32>, vector<2x512xf32> -> vector<2x512xf32>
    %51 = arith.index_cast %c2_i32 : i32 to index
    %c0_16 = arith.constant 0 : index
    %c0_17 = arith.constant 0 : index
    %52 = vector.load %arg0[%51, %c0_16, %c0_17] : memref<9x2x512xf32, #tpu.memory_space<vmem>>, vector<1x2x512xf32>
    %53 = vector.shape_cast %52 : vector<1x2x512xf32> to vector<2x512xf32>
    %54 = arith.addf %50, %53 : vector<2x512xf32>
    %55 = math.tanh %54 : vector<2x512xf32>
    %56 = vector.extract_strided_slice %55 {offsets = [0, 0], sizes = [2, 256], strides = [1, 1]} : vector<2x512xf32> to vector<2x256xf32>
    %cst_18 = arith.constant 1.000000e+00 : f32
    %57 = vector.broadcast %cst_18 : f32 to vector<2x256xf32>
    %58 = arith.addf %56, %57 : vector<2x256xf32>
    %cst_19 = arith.constant 5.000000e-01 : f32
    %59 = vector.broadcast %cst_19 : f32 to vector<2x256xf32>
    %60 = arith.mulf %59, %58 : vector<2x256xf32>
    %61 = vector.extract_strided_slice %60 {offsets = [0, 0], sizes = [2, 128], strides = [1, 1]} : vector<2x256xf32> to vector<2x128xf32>
    %62 = vector.extract_strided_slice %60 {offsets = [0, 128], sizes = [2, 128], strides = [1, 1]} : vector<2x256xf32> to vector<2x128xf32>
    %63 = vector.extract_strided_slice %55 {offsets = [0, 256], sizes = [2, 128], strides = [1, 1]} : vector<2x512xf32> to vector<2x128xf32>
    %64 = vector.extract_strided_slice %55 {offsets = [0, 384], sizes = [2, 128], strides = [1, 1]} : vector<2x512xf32> to vector<2x128xf32>
    %cst_20 = arith.constant 1.000000e+00 : f32
    %65 = vector.broadcast %cst_20 : f32 to vector<2x128xf32>
    %66 = arith.addf %64, %65 : vector<2x128xf32>
    %cst_21 = arith.constant 5.000000e-01 : f32
    %67 = vector.broadcast %cst_21 : f32 to vector<2x128xf32>
    %68 = arith.mulf %67, %66 : vector<2x128xf32>
    %69 = arith.mulf %62, %47 : vector<2x128xf32>
    %70 = arith.mulf %61, %63 : vector<2x128xf32>
    %71 = arith.addf %69, %70 : vector<2x128xf32>
    %72 = math.tanh %71 : vector<2x128xf32>
    %73 = arith.mulf %68, %72 : vector<2x128xf32>
    %c3_i32 = arith.constant 3 : i32
    %cst_22 = arith.constant dense<0.000000e+00> : vector<2x512xf32>
    %74 = tpu.matmul %73, %0, %cst_22 {dimension_numbers = #tpu.dot_dimension_numbers<[1], [0], [0], [1], [0, 0, 1, 1], [], []>} : vector<2x128xf32>, vector<128x512xf32>, vector<2x512xf32> -> vector<2x512xf32>
    %75 = arith.index_cast %c3_i32 : i32 to index
    %c0_23 = arith.constant 0 : index
    %c0_24 = arith.constant 0 : index
    %76 = vector.load %arg0[%75, %c0_23, %c0_24] : memref<9x2x512xf32, #tpu.memory_space<vmem>>, vector<1x2x512xf32>
    %77 = vector.shape_cast %76 : vector<1x2x512xf32> to vector<2x512xf32>
    %78 = arith.addf %74, %77 : vector<2x512xf32>
    %79 = math.tanh %78 : vector<2x512xf32>
    %80 = vector.extract_strided_slice %79 {offsets = [0, 0], sizes = [2, 256], strides = [1, 1]} : vector<2x512xf32> to vector<2x256xf32>
    %cst_25 = arith.constant 1.000000e+00 : f32
    %81 = vector.broadcast %cst_25 : f32 to vector<2x256xf32>
    %82 = arith.addf %80, %81 : vector<2x256xf32>
    %cst_26 = arith.constant 5.000000e-01 : f32
    %83 = vector.broadcast %cst_26 : f32 to vector<2x256xf32>
    %84 = arith.mulf %83, %82 : vector<2x256xf32>
    %85 = vector.extract_strided_slice %84 {offsets = [0, 0], sizes = [2, 128], strides = [1, 1]} : vector<2x256xf32> to vector<2x128xf32>
    %86 = vector.extract_strided_slice %84 {offsets = [0, 128], sizes = [2, 128], strides = [1, 1]} : vector<2x256xf32> to vector<2x128xf32>
    %87 = vector.extract_strided_slice %79 {offsets = [0, 256], sizes = [2, 128], strides = [1, 1]} : vector<2x512xf32> to vector<2x128xf32>
    %88 = vector.extract_strided_slice %79 {offsets = [0, 384], sizes = [2, 128], strides = [1, 1]} : vector<2x512xf32> to vector<2x128xf32>
    %cst_27 = arith.constant 1.000000e+00 : f32
    %89 = vector.broadcast %cst_27 : f32 to vector<2x128xf32>
    %90 = arith.addf %88, %89 : vector<2x128xf32>
    %cst_28 = arith.constant 5.000000e-01 : f32
    %91 = vector.broadcast %cst_28 : f32 to vector<2x128xf32>
    %92 = arith.mulf %91, %90 : vector<2x128xf32>
    %93 = arith.mulf %86, %71 : vector<2x128xf32>
    %94 = arith.mulf %85, %87 : vector<2x128xf32>
    %95 = arith.addf %93, %94 : vector<2x128xf32>
    %96 = math.tanh %95 : vector<2x128xf32>
    %97 = arith.mulf %92, %96 : vector<2x128xf32>
    %c4_i32 = arith.constant 4 : i32
    %cst_29 = arith.constant dense<0.000000e+00> : vector<2x512xf32>
    %98 = tpu.matmul %97, %0, %cst_29 {dimension_numbers = #tpu.dot_dimension_numbers<[1], [0], [0], [1], [0, 0, 1, 1], [], []>} : vector<2x128xf32>, vector<128x512xf32>, vector<2x512xf32> -> vector<2x512xf32>
    %99 = arith.index_cast %c4_i32 : i32 to index
    %c0_30 = arith.constant 0 : index
    %c0_31 = arith.constant 0 : index
    %100 = vector.load %arg0[%99, %c0_30, %c0_31] : memref<9x2x512xf32, #tpu.memory_space<vmem>>, vector<1x2x512xf32>
    %101 = vector.shape_cast %100 : vector<1x2x512xf32> to vector<2x512xf32>
    %102 = arith.addf %98, %101 : vector<2x512xf32>
    %103 = math.tanh %102 : vector<2x512xf32>
    %104 = vector.extract_strided_slice %103 {offsets = [0, 0], sizes = [2, 256], strides = [1, 1]} : vector<2x512xf32> to vector<2x256xf32>
    %cst_32 = arith.constant 1.000000e+00 : f32
    %105 = vector.broadcast %cst_32 : f32 to vector<2x256xf32>
    %106 = arith.addf %104, %105 : vector<2x256xf32>
    %cst_33 = arith.constant 5.000000e-01 : f32
    %107 = vector.broadcast %cst_33 : f32 to vector<2x256xf32>
    %108 = arith.mulf %107, %106 : vector<2x256xf32>
    %109 = vector.extract_strided_slice %108 {offsets = [0, 0], sizes = [2, 128], strides = [1, 1]} : vector<2x256xf32> to vector<2x128xf32>
    %110 = vector.extract_strided_slice %108 {offsets = [0, 128], sizes = [2, 128], strides = [1, 1]} : vector<2x256xf32> to vector<2x128xf32>
    %111 = vector.extract_strided_slice %103 {offsets = [0, 256], sizes = [2, 128], strides = [1, 1]} : vector<2x512xf32> to vector<2x128xf32>
    %112 = vector.extract_strided_slice %103 {offsets = [0, 384], sizes = [2, 128], strides = [1, 1]} : vector<2x512xf32> to vector<2x128xf32>
    %cst_34 = arith.constant 1.000000e+00 : f32
    %113 = vector.broadcast %cst_34 : f32 to vector<2x128xf32>
    %114 = arith.addf %112, %113 : vector<2x128xf32>
    %cst_35 = arith.constant 5.000000e-01 : f32
    %115 = vector.broadcast %cst_35 : f32 to vector<2x128xf32>
    %116 = arith.mulf %115, %114 : vector<2x128xf32>
    %117 = arith.mulf %110, %95 : vector<2x128xf32>
    %118 = arith.mulf %109, %111 : vector<2x128xf32>
    %119 = arith.addf %117, %118 : vector<2x128xf32>
    %120 = math.tanh %119 : vector<2x128xf32>
    %121 = arith.mulf %116, %120 : vector<2x128xf32>
    %c5_i32 = arith.constant 5 : i32
    %cst_36 = arith.constant dense<0.000000e+00> : vector<2x512xf32>
    %122 = tpu.matmul %121, %0, %cst_36 {dimension_numbers = #tpu.dot_dimension_numbers<[1], [0], [0], [1], [0, 0, 1, 1], [], []>} : vector<2x128xf32>, vector<128x512xf32>, vector<2x512xf32> -> vector<2x512xf32>
    %123 = arith.index_cast %c5_i32 : i32 to index
    %c0_37 = arith.constant 0 : index
    %c0_38 = arith.constant 0 : index
    %124 = vector.load %arg0[%123, %c0_37, %c0_38] : memref<9x2x512xf32, #tpu.memory_space<vmem>>, vector<1x2x512xf32>
    %125 = vector.shape_cast %124 : vector<1x2x512xf32> to vector<2x512xf32>
    %126 = arith.addf %122, %125 : vector<2x512xf32>
    %127 = math.tanh %126 : vector<2x512xf32>
    %128 = vector.extract_strided_slice %127 {offsets = [0, 0], sizes = [2, 256], strides = [1, 1]} : vector<2x512xf32> to vector<2x256xf32>
    %cst_39 = arith.constant 1.000000e+00 : f32
    %129 = vector.broadcast %cst_39 : f32 to vector<2x256xf32>
    %130 = arith.addf %128, %129 : vector<2x256xf32>
    %cst_40 = arith.constant 5.000000e-01 : f32
    %131 = vector.broadcast %cst_40 : f32 to vector<2x256xf32>
    %132 = arith.mulf %131, %130 : vector<2x256xf32>
    %133 = vector.extract_strided_slice %132 {offsets = [0, 0], sizes = [2, 128], strides = [1, 1]} : vector<2x256xf32> to vector<2x128xf32>
    %134 = vector.extract_strided_slice %132 {offsets = [0, 128], sizes = [2, 128], strides = [1, 1]} : vector<2x256xf32> to vector<2x128xf32>
    %135 = vector.extract_strided_slice %127 {offsets = [0, 256], sizes = [2, 128], strides = [1, 1]} : vector<2x512xf32> to vector<2x128xf32>
    %136 = vector.extract_strided_slice %127 {offsets = [0, 384], sizes = [2, 128], strides = [1, 1]} : vector<2x512xf32> to vector<2x128xf32>
    %cst_41 = arith.constant 1.000000e+00 : f32
    %137 = vector.broadcast %cst_41 : f32 to vector<2x128xf32>
    %138 = arith.addf %136, %137 : vector<2x128xf32>
    %cst_42 = arith.constant 5.000000e-01 : f32
    %139 = vector.broadcast %cst_42 : f32 to vector<2x128xf32>
    %140 = arith.mulf %139, %138 : vector<2x128xf32>
    %141 = arith.mulf %134, %119 : vector<2x128xf32>
    %142 = arith.mulf %133, %135 : vector<2x128xf32>
    %143 = arith.addf %141, %142 : vector<2x128xf32>
    %144 = math.tanh %143 : vector<2x128xf32>
    %145 = arith.mulf %140, %144 : vector<2x128xf32>
    %c6_i32 = arith.constant 6 : i32
    %cst_43 = arith.constant dense<0.000000e+00> : vector<2x512xf32>
    %146 = tpu.matmul %145, %0, %cst_43 {dimension_numbers = #tpu.dot_dimension_numbers<[1], [0], [0], [1], [0, 0, 1, 1], [], []>} : vector<2x128xf32>, vector<128x512xf32>, vector<2x512xf32> -> vector<2x512xf32>
    %147 = arith.index_cast %c6_i32 : i32 to index
    %c0_44 = arith.constant 0 : index
    %c0_45 = arith.constant 0 : index
    %148 = vector.load %arg0[%147, %c0_44, %c0_45] : memref<9x2x512xf32, #tpu.memory_space<vmem>>, vector<1x2x512xf32>
    %149 = vector.shape_cast %148 : vector<1x2x512xf32> to vector<2x512xf32>
    %150 = arith.addf %146, %149 : vector<2x512xf32>
    %151 = math.tanh %150 : vector<2x512xf32>
    %152 = vector.extract_strided_slice %151 {offsets = [0, 0], sizes = [2, 256], strides = [1, 1]} : vector<2x512xf32> to vector<2x256xf32>
    %cst_46 = arith.constant 1.000000e+00 : f32
    %153 = vector.broadcast %cst_46 : f32 to vector<2x256xf32>
    %154 = arith.addf %152, %153 : vector<2x256xf32>
    %cst_47 = arith.constant 5.000000e-01 : f32
    %155 = vector.broadcast %cst_47 : f32 to vector<2x256xf32>
    %156 = arith.mulf %155, %154 : vector<2x256xf32>
    %157 = vector.extract_strided_slice %156 {offsets = [0, 0], sizes = [2, 128], strides = [1, 1]} : vector<2x256xf32> to vector<2x128xf32>
    %158 = vector.extract_strided_slice %156 {offsets = [0, 128], sizes = [2, 128], strides = [1, 1]} : vector<2x256xf32> to vector<2x128xf32>
    %159 = vector.extract_strided_slice %151 {offsets = [0, 256], sizes = [2, 128], strides = [1, 1]} : vector<2x512xf32> to vector<2x128xf32>
    %160 = vector.extract_strided_slice %151 {offsets = [0, 384], sizes = [2, 128], strides = [1, 1]} : vector<2x512xf32> to vector<2x128xf32>
    %cst_48 = arith.constant 1.000000e+00 : f32
    %161 = vector.broadcast %cst_48 : f32 to vector<2x128xf32>
    %162 = arith.addf %160, %161 : vector<2x128xf32>
    %cst_49 = arith.constant 5.000000e-01 : f32
    %163 = vector.broadcast %cst_49 : f32 to vector<2x128xf32>
    %164 = arith.mulf %163, %162 : vector<2x128xf32>
    %165 = arith.mulf %158, %143 : vector<2x128xf32>
    %166 = arith.mulf %157, %159 : vector<2x128xf32>
    %167 = arith.addf %165, %166 : vector<2x128xf32>
    %168 = math.tanh %167 : vector<2x128xf32>
    %169 = arith.mulf %164, %168 : vector<2x128xf32>
    %c7_i32 = arith.constant 7 : i32
    %cst_50 = arith.constant dense<0.000000e+00> : vector<2x512xf32>
    %170 = tpu.matmul %169, %0, %cst_50 {dimension_numbers = #tpu.dot_dimension_numbers<[1], [0], [0], [1], [0, 0, 1, 1], [], []>} : vector<2x128xf32>, vector<128x512xf32>, vector<2x512xf32> -> vector<2x512xf32>
    %171 = arith.index_cast %c7_i32 : i32 to index
    %c0_51 = arith.constant 0 : index
    %c0_52 = arith.constant 0 : index
    %172 = vector.load %arg0[%171, %c0_51, %c0_52] : memref<9x2x512xf32, #tpu.memory_space<vmem>>, vector<1x2x512xf32>
    %173 = vector.shape_cast %172 : vector<1x2x512xf32> to vector<2x512xf32>
    %174 = arith.addf %170, %173 : vector<2x512xf32>
    %175 = math.tanh %174 : vector<2x512xf32>
    %176 = vector.extract_strided_slice %175 {offsets = [0, 0], sizes = [2, 256], strides = [1, 1]} : vector<2x512xf32> to vector<2x256xf32>
    %cst_53 = arith.constant 1.000000e+00 : f32
    %177 = vector.broadcast %cst_53 : f32 to vector<2x256xf32>
    %178 = arith.addf %176, %177 : vector<2x256xf32>
    %cst_54 = arith.constant 5.000000e-01 : f32
    %179 = vector.broadcast %cst_54 : f32 to vector<2x256xf32>
    %180 = arith.mulf %179, %178 : vector<2x256xf32>
    %181 = vector.extract_strided_slice %180 {offsets = [0, 0], sizes = [2, 128], strides = [1, 1]} : vector<2x256xf32> to vector<2x128xf32>
    %182 = vector.extract_strided_slice %180 {offsets = [0, 128], sizes = [2, 128], strides = [1, 1]} : vector<2x256xf32> to vector<2x128xf32>
    %183 = vector.extract_strided_slice %175 {offsets = [0, 256], sizes = [2, 128], strides = [1, 1]} : vector<2x512xf32> to vector<2x128xf32>
    %184 = vector.extract_strided_slice %175 {offsets = [0, 384], sizes = [2, 128], strides = [1, 1]} : vector<2x512xf32> to vector<2x128xf32>
    %cst_55 = arith.constant 1.000000e+00 : f32
    %185 = vector.broadcast %cst_55 : f32 to vector<2x128xf32>
    %186 = arith.addf %184, %185 : vector<2x128xf32>
    %cst_56 = arith.constant 5.000000e-01 : f32
    %187 = vector.broadcast %cst_56 : f32 to vector<2x128xf32>
    %188 = arith.mulf %187, %186 : vector<2x128xf32>
    %189 = arith.mulf %182, %167 : vector<2x128xf32>
    %190 = arith.mulf %181, %183 : vector<2x128xf32>
    %191 = arith.addf %189, %190 : vector<2x128xf32>
    %192 = math.tanh %191 : vector<2x128xf32>
    %193 = arith.mulf %188, %192 : vector<2x128xf32>
    %c8_i32 = arith.constant 8 : i32
    %cst_57 = arith.constant dense<0.000000e+00> : vector<2x512xf32>
    %194 = tpu.matmul %193, %0, %cst_57 {dimension_numbers = #tpu.dot_dimension_numbers<[1], [0], [0], [1], [0, 0, 1, 1], [], []>} : vector<2x128xf32>, vector<128x512xf32>, vector<2x512xf32> -> vector<2x512xf32>
    %195 = arith.index_cast %c8_i32 : i32 to index
    %c0_58 = arith.constant 0 : index
    %c0_59 = arith.constant 0 : index
    %196 = vector.load %arg0[%195, %c0_58, %c0_59] : memref<9x2x512xf32, #tpu.memory_space<vmem>>, vector<1x2x512xf32>
    %197 = vector.shape_cast %196 : vector<1x2x512xf32> to vector<2x512xf32>
    %198 = arith.addf %194, %197 : vector<2x512xf32>
    %199 = math.tanh %198 : vector<2x512xf32>
    %200 = vector.extract_strided_slice %199 {offsets = [0, 0], sizes = [2, 256], strides = [1, 1]} : vector<2x512xf32> to vector<2x256xf32>
    %cst_60 = arith.constant 1.000000e+00 : f32
    %201 = vector.broadcast %cst_60 : f32 to vector<2x256xf32>
    %202 = arith.addf %200, %201 : vector<2x256xf32>
    %cst_61 = arith.constant 5.000000e-01 : f32
    %203 = vector.broadcast %cst_61 : f32 to vector<2x256xf32>
    %204 = arith.mulf %203, %202 : vector<2x256xf32>
    %205 = vector.extract_strided_slice %204 {offsets = [0, 0], sizes = [2, 128], strides = [1, 1]} : vector<2x256xf32> to vector<2x128xf32>
    %206 = vector.extract_strided_slice %204 {offsets = [0, 128], sizes = [2, 128], strides = [1, 1]} : vector<2x256xf32> to vector<2x128xf32>
    %207 = vector.extract_strided_slice %199 {offsets = [0, 256], sizes = [2, 128], strides = [1, 1]} : vector<2x512xf32> to vector<2x128xf32>
    %208 = vector.extract_strided_slice %199 {offsets = [0, 384], sizes = [2, 128], strides = [1, 1]} : vector<2x512xf32> to vector<2x128xf32>
    %cst_62 = arith.constant 1.000000e+00 : f32
    %209 = vector.broadcast %cst_62 : f32 to vector<2x128xf32>
    %210 = arith.addf %208, %209 : vector<2x128xf32>
    %cst_63 = arith.constant 5.000000e-01 : f32
    %211 = vector.broadcast %cst_63 : f32 to vector<2x128xf32>
    %212 = arith.mulf %211, %210 : vector<2x128xf32>
    %213 = arith.mulf %206, %191 : vector<2x128xf32>
    %214 = arith.mulf %205, %207 : vector<2x128xf32>
    %215 = arith.addf %213, %214 : vector<2x128xf32>
    %216 = math.tanh %215 : vector<2x128xf32>
    %217 = arith.mulf %212, %216 : vector<2x128xf32>
    %c9_i32 = arith.constant 9 : i32
    %218 = vector.extract_strided_slice %217 {offsets = [0, 64], sizes = [2, 64], strides = [1, 1]} : vector<2x128xf32> to vector<2x64xf32>
    %c0_64 = arith.constant 0 : index
    %c0_65 = arith.constant 0 : index
    %219 = vector.load %arg2[%c0_64, %c0_65] : memref<1x64xf32, #tpu.memory_space<vmem>>, vector<1x64xf32>
    %220 = vector.broadcast %219 : vector<1x64xf32> to vector<2x64xf32>
    %221 = arith.mulf %218, %220 : vector<2x64xf32>
    %cst_66 = arith.constant dense<0.000000e+00> : vector<2xf32>
    %222 = vector.multi_reduction <add>, %221, %cst_66 [1] : vector<2x64xf32> to vector<2xf32>
    %223 = vector.shape_cast %222 : vector<2xf32> to vector<2x1xf32>
    %c0_67 = arith.constant 0 : index
    %c0_68 = arith.constant 0 : index
    %224 = vector.load %arg3[%c0_67, %c0_68] : memref<1x1xf32, #tpu.memory_space<vmem>>, vector<1x1xf32>
    %225 = vector.broadcast %224 : vector<1x1xf32> to vector<2x1xf32>
    %226 = arith.addf %223, %225 : vector<2x1xf32>
    %c0_69 = arith.constant 0 : index
    %c0_70 = arith.constant 0 : index
    %227 = vector.load %arg4[%c0_69, %c0_70] : memref<2x1xf32, #tpu.memory_space<vmem>>, vector<2x1xf32>
    tpu.vector_store %arg4[%c0_69, %c0_70], %226 {strides = array<i32>} : memref<2x1xf32, #tpu.memory_space<vmem>>, vector<2x1xf32>,
    return
  }
}

</mosaic_0001>

<llo_original>
// kernel: tpu_custom_call.1
$region0: #{tpu_custom_call.1}
  #allocation0 [shape = 'u32[]', space=smem, size = 0x4, offset = 0x4, fixed_abs, tag = 'smem constant byte address 0x4 - core index']
  #allocation1 [shape = 'u32[72,128]{1,0:T(1,128)}', space=vmem, size = 0x9000, scoped, tag = 'internal scratch']
  #allocation2 [shape = 'f32[1,1]{1,0:T(1,128)S(1)}', space=vmem, size = 0x200, scoped, tag = 'scoped memory for tpu_custom_call.1']
  %s0 = inlined_call_operand.hbm [shape: f32[9,2,512], index: 0, kind: input, shape index: {}]
  %s1 = inlined_call_operand.hbm [shape: f32[128,512], index: 1, kind: input, shape index: {}]
  %s2 = inlined_call_operand.vmem [shape: f32[1,64], index: 2, kind: input, shape index: {}]
  %s3 = inlined_call_operand.<no memory space> [shape: f32[1,1], index: 3, kind: input, shape index: {}]
  %s4 = inlined_call_operand.vmem [shape: f32[2,1], index: 4, kind: output, shape index: {}]
  %s5 = sld [smem:[#allocation0]]
  $region34: #{tpu_custom_call.1} parent=0
    _
  %s7 = ssub.s32 1, %s5
  %s8 = scalar_select 0, %s7, %s5
  %v9 = vstv %s3
  %10 = vst [vmem:[#allocation2] sm:$0x1] %v9
  $region1: #{tpu_custom_call.1} parent=0
    #allocation3 [shape = 'u8[36864]{0}', space=vmem, size = 0x9000, scoped, tag = 'input window, operand 0, single buffered']
    #allocation4 [shape = 's32[1]{0}', space=sflag, size = 0x4, scoped, tag = 'scoped memory for tpu_custom_call.1']
    #allocation5 [shape = 'u8[262144]{0}', space=vmem, size = 0x40000, scoped, tag = 'input window, operand 1, single buffered']
    #allocation6 [shape = 's32[1]{0}', space=sflag, size = 0x4, scoped, tag = 'scoped memory for tpu_custom_call.1']
    %11 = vsyncpa [#allocation4], 0
    %12 = vsyncpa [#allocation6], 0
    // Predicated region
    $region2: #{tpu_custom_call.1} parent=1 // pred_check
      _
    $region3: #{tpu_custom_call.1} parent=1 // pred_check_branch
      %14 = sbr.rel (0) target = $region5
    $region4: #{tpu_custom_call.1} parent=1 // pred_region
      %16 = vsyncadd [#allocation4], 0
      %s17 = sshll.u32 %s0, 4
      %s18 = int_to_ptr.hbm [resolvable:$true] %s17
      %s19 = sshll.u32 [#allocation3], 4
      %s20 = int_to_ptr.vmem [resolvable:$true] %s19
      %25 = dma.hbm_to_vmem [thread:$0]  %s18, 1152, %s20, [#allocation4], 128, 128, 8
    $region5: #{tpu_custom_call.1} parent=1 // pred_fallthru
      _
    // Predicated region
    $region6: #{tpu_custom_call.1} parent=1 // pred_check
      _
    $region7: #{tpu_custom_call.1} parent=1 // pred_check_branch
      %27 = sbr.rel (0) target = $region9
    $region8: #{tpu_custom_call.1} parent=1 // pred_region
      %29 = vsyncadd [#allocation6], 0
      %s30 = sshll.u32 %s1, 4
      %s31 = int_to_ptr.hbm [resolvable:$true] %s30
      %s32 = sshll.u32 [#allocation5], 4
      %s33 = int_to_ptr.vmem [resolvable:$true] %s32
      %38 = dma.hbm_to_vmem [thread:$0]  %s31, 8192, %s33, [#allocation6], 512, 512, 32
    $region9: #{tpu_custom_call.1} parent=1 // pred_fallthru
      _
    // Predicated region
    $region10: #{tpu_custom_call.1} parent=1 // pred_check
      _
    $region11: #{tpu_custom_call.1} parent=1 // pred_check_branch
      %40 = sbr.rel (0) target = $region13
    $region12: #{tpu_custom_call.1} parent=1 // pred_region
      _
    $region13: #{tpu_custom_call.1} parent=1 // pred_fallthru
      _
    // Predicated region
    $region14: #{tpu_custom_call.1} parent=1 // pred_check
      _
    $region15: #{tpu_custom_call.1} parent=1 // pred_check_branch
      %42 = sbr.rel (0) target = $region17
    $region16: #{tpu_custom_call.1} parent=1 // pred_region
      _
    $region17: #{tpu_custom_call.1} parent=1 // pred_fallthru
      _
    // Predicated region
    $region18: #{tpu_custom_call.1} parent=1 // pred_check
      _
    $region19: #{tpu_custom_call.1} parent=1 // pred_check_branch
      %44 = sbr.rel (0) target = $region21
    $region20: #{tpu_custom_call.1} parent=1 // pred_region
      %46 = dma.done [#allocation4], 1152
    $region21: #{tpu_custom_call.1} parent=1 // pred_fallthru
      _
    // Predicated region
    $region22: #{tpu_custom_call.1} parent=1 // pred_check
      _
    $region23: #{tpu_custom_call.1} parent=1 // pred_check_branch
      %48 = sbr.rel (0) target = $region25
    $region24: #{tpu_custom_call.1} parent=1 // pred_region
      %50 = dma.done [#allocation6], 8192
    $region25: #{tpu_custom_call.1} parent=1 // pred_fallthru
      _
    %v51 = vld [vmem:[#allocation5] sm:$0xff]
    %v52 = vld [vmem:[#allocation5 + $0x8] sm:$0xff]
    %v53 = vld [vmem:[#allocation5 + $0x10] sm:$0xff]
    %v54 = vld [vmem:[#allocation5 + $0x18] sm:$0xff]
    %v55 = vld [vmem:[#allocation5 + $0x20] sm:$0xff]
    %v56 = vld [vmem:[#allocation5 + $0x28] sm:$0xff]
    %v57 = vld [vmem:[#allocation5 + $0x30] sm:$0xff]
    %v58 = vld [vmem:[#allocation5 + $0x38] sm:$0xff]
    %v59 = vld [vmem:[#allocation5 + $0x40] sm:$0xff]
    %v60 = vld [vmem:[#allocation5 + $0x48] sm:$0xff]
    %v61 = vld [vmem:[#allocation5 + $0x50] sm:$0xff]
    %v62 = vld [vmem:[#allocation5 + $0x58] sm:$0xff]
    %v63 = vld [vmem:[#allocation5 + $0x60] sm:$0xff]
    %v64 = vld [vmem:[#allocation5 + $0x68] sm:$0xff]
    %v65 = vld [vmem:[#allocation5 + $0x70] sm:$0xff]
    %v66 = vld [vmem:[#allocation5 + $0x78] sm:$0xff]
    %v67 = vld [vmem:[#allocation5 + $0x80] sm:$0xff]
    %v68 = vld [vmem:[#allocation5 + $0x88] sm:$0xff]
    %v69 = vld [vmem:[#allocation5 + $0x90] sm:$0xff]
    %v70 = vld [vmem:[#allocation5 + $0x98] sm:$0xff]
    %v71 = vld [vmem:[#allocation5 + $0xa0] sm:$0xff]
    %v72 = vld [vmem:[#allocation5 + $0xa8] sm:$0xff]
    %v73 = vld [vmem:[#allocation5 + $0xb0] sm:$0xff]
    %v74 = vld [vmem:[#allocation5 + $0xb8] sm:$0xff]
    %v75 = vld [vmem:[#allocation5 + $0xc0] sm:$0xff]
    %v76 = vld [vmem:[#allocation5 + $0xc8] sm:$0xff]
    %v77 = vld [vmem:[#allocation5 + $0xd0] sm:$0xff]
    %v78 = vld [vmem:[#allocation5 + $0xd8] sm:$0xff]
    %v79 = vld [vmem:[#allocation5 + $0xe0] sm:$0xff]
    %v80 = vld [vmem:[#allocation5 + $0xe8] sm:$0xff]
    %v81 = vld [vmem:[#allocation5 + $0xf0] sm:$0xff]
    %v82 = vld [vmem:[#allocation5 + $0xf8] sm:$0xff]
    %v83 = vld [vmem:[#allocation5 + $0x100] sm:$0xff]
    %v84 = vld [vmem:[#allocation5 + $0x108] sm:$0xff]
    %v85 = vld [vmem:[#allocation5 + $0x110] sm:$0xff]
    %v86 = vld [vmem:[#allocation5 + $0x118] sm:$0xff]
    %v87 = vld [vmem:[#allocation5 + $0x120] sm:$0xff]
    %v88 = vld [vmem:[#allocation5 + $0x128] sm:$0xff]
    %v89 = vld [vmem:[#allocation5 + $0x130] sm:$0xff]
    %v90 = vld [vmem:[#allocation5 + $0x138] sm:$0xff]
    %v91 = vld [vmem:[#allocation5 + $0x140] sm:$0xff]
    %v92 = vld [vmem:[#allocation5 + $0x148] sm:$0xff]
    %v93 = vld [vmem:[#allocation5 + $0x150] sm:$0xff]
    %v94 = vld [vmem:[#allocation5 + $0x158] sm:$0xff]
    %v95 = vld [vmem:[#allocation5 + $0x160] sm:$0xff]
    %v96 = vld [vmem:[#allocation5 + $0x168] sm:$0xff]
    %v97 = vld [vmem:[#allocation5 + $0x170] sm:$0xff]
    %v98 = vld [vmem:[#allocation5 + $0x178] sm:$0xff]
    %v99 = vld [vmem:[#allocation5 + $0x180] sm:$0xff]
    %v100 = vld [vmem:[#allocation5 + $0x188] sm:$0xff]
    %v101 = vld [vmem:[#allocation5 + $0x190] sm:$0xff]
    %v102 = vld [vmem:[#allocation5 + $0x198] sm:$0xff]
    %v103 = vld [vmem:[#allocation5 + $0x1a0] sm:$0xff]
    %v104 = vld [vmem:[#allocation5 + $0x1a8] sm:$0xff]
    %v105 = vld [vmem:[#allocation5 + $0x1b0] sm:$0xff]
    %v106 = vld [vmem:[#allocation5 + $0x1b8] sm:$0xff]
    %v107 = vld [vmem:[#allocation5 + $0x1c0] sm:$0xff]
    %v108 = vld [vmem:[#allocation5 + $0x1c8] sm:$0xff]
    %v109 = vld [vmem:[#allocation5 + $0x1d0] sm:$0xff]
    %v110 = vld [vmem:[#allocation5 + $0x1d8] sm:$0xff]
    %v111 = vld [vmem:[#allocation5 + $0x1e0] sm:$0xff]
    %v112 = vld [vmem:[#allocation5 + $0x1e8] sm:$0xff]
    %v113 = vld [vmem:[#allocation5 + $0x1f0] sm:$0xff]
    %v114 = vld [vmem:[#allocation5 + $0x1f8] sm:$0xff]
    %v115 = vld [vmem:[#allocation3] sm:$0xff]
    %117 = vst [vmem:[#allocation1] ss:$4 sm:$0xff] %v115
    %v118 = vld.sshfl [vmem:[#allocation1] sm:$0xff pattern:$0x73625140]
    %v119 = vld.sshfl [vmem:[#allocation1 + $0x8] sm:$0xff pattern:$0x73625140]
    %v120 = vld.sshfl [vmem:[#allocation1 + $0x10] sm:$0xff pattern:$0x73625140]
    %v121 = vld.sshfl [vmem:[#allocation1 + $0x18] sm:$0xff pattern:$0x73625140]
    %126 = vmatpush.msra.mxu0 %v111
    %127 = vmatpush.msra.mxu0 %v107
    %128 = vmatpush.msra.mxu0 %v103
    %129 = vmatpush.msra.mxu0 %v99
    %130 = vmatpush.msra.mxu0 %v95
    %131 = vmatpush.msra.mxu0 %v91
    %132 = vmatpush.msra.mxu0 %v87
    %133 = vmatpush.msra.mxu0 %v83
    %134 = vmatpush.msra.mxu0 %v79
    %135 = vmatpush.msra.mxu0 %v75
    %136 = vmatpush.msra.mxu0 %v71
    %137 = vmatpush.msra.mxu0 %v67
    %138 = vmatpush.msra.mxu0 %v63
    %139 = vmatpush.msra.mxu0 %v59
    %140 = vmatpush.msra.mxu0 %v55
    %141 = vmatpush.msra.mxu0 %v51
    %142 = vmatmul.f32.gmra.mxu0 0.0
    %v143 = vpop.f32.mrf.mxu0
    %v144 = vadd.f32 %v118, %v143
    %145 = vdwg.mxu0
    %146 = vmatpush.msra.mxu0 %v112
    %147 = vmatpush.msra.mxu0 %v108
    %148 = vmatpush.msra.mxu0 %v104
    %149 = vmatpush.msra.mxu0 %v100
    %150 = vmatpush.msra.mxu0 %v96
    %151 = vmatpush.msra.mxu0 %v92
    %152 = vmatpush.msra.mxu0 %v88
    %153 = vmatpush.msra.mxu0 %v84
    %154 = vmatpush.msra.mxu0 %v80
    %155 = vmatpush.msra.mxu0 %v76
    %156 = vmatpush.msra.mxu0 %v72
    %157 = vmatpush.msra.mxu0 %v68
    %158 = vmatpush.msra.mxu0 %v64
    %159 = vmatpush.msra.mxu0 %v60
    %160 = vmatpush.msra.mxu0 %v56
    %161 = vmatpush.msra.mxu0 %v52
    %162 = vmatmul.f32.gmra.mxu0 0.0
    %v163 = vpop.f32.mrf.mxu0
    %v164 = vadd.f32 %v119, %v163
    %165 = vdwg.mxu0
    %166 = vmatpush.msra.mxu0 %v113
    %167 = vmatpush.msra.mxu0 %v109
    %168 = vmatpush.msra.mxu0 %v105
    %169 = vmatpush.msra.mxu0 %v101
    %170 = vmatpush.msra.mxu0 %v97
    %171 = vmatpush.msra.mxu0 %v93
    %172 = vmatpush.msra.mxu0 %v89
    %173 = vmatpush.msra.mxu0 %v85
    %174 = vmatpush.msra.mxu0 %v81
    %175 = vmatpush.msra.mxu0 %v77
    %176 = vmatpush.msra.mxu0 %v73
    %177 = vmatpush.msra.mxu0 %v69
    %178 = vmatpush.msra.mxu0 %v65
    %179 = vmatpush.msra.mxu0 %v61
    %180 = vmatpush.msra.mxu0 %v57
    %181 = vmatpush.msra.mxu0 %v53
    %182 = vmatmul.f32.gmra.mxu0 0.0
    %v183 = vpop.f32.mrf.mxu0
    %v184 = vadd.f32 %v120, %v183
    %185 = vdwg.mxu0
    %186 = vmatpush.msra.mxu0 %v114
    %187 = vmatpush.msra.mxu0 %v110
    %188 = vmatpush.msra.mxu0 %v106
    %189 = vmatpush.msra.mxu0 %v102
    %190 = vmatpush.msra.mxu0 %v98
    %191 = vmatpush.msra.mxu0 %v94
    %192 = vmatpush.msra.mxu0 %v90
    %193 = vmatpush.msra.mxu0 %v86
    %194 = vmatpush.msra.mxu0 %v82
    %195 = vmatpush.msra.mxu0 %v78
    %196 = vmatpush.msra.mxu0 %v74
    %197 = vmatpush.msra.mxu0 %v70
    %198 = vmatpush.msra.mxu0 %v66
    %199 = vmatpush.msra.mxu0 %v62
    %200 = vmatpush.msra.mxu0 %v58
    %201 = vmatpush.msra.mxu0 %v54
    %202 = vmatmul.f32.gmra.mxu0 0.0
    %v203 = vpop.f32.mrf.mxu0
    %v204 = vadd.f32 %v121, %v203
    %205 = vdwg.mxu0
    %v206 = vtanh.pop %v144
    %v207 = vtanh.pop %v164
    %v208 = vtanh.pop %v184
    %v209 = vtanh.pop %v204
    %v210 = vadd.f32 %v206, 1.0
    %v211 = vadd.f32 %v207, 1.0
    %v212 = vmul.f32 %v210, 0.5
    %v213 = vmul.f32 %v211, 0.5
    %v214 = vadd.f32 %v209, 1.0
    %v215 = vmul.f32 %v214, 0.5
    %v216 = vmul.f32 %v213, 0.0
    %v217 = vmul.f32 %v212, %v208
    %v218 = vadd.f32 %v216, %v217
    %v219 = vtanh.pop %v218
    %v220 = vmul.f32 %v215, %v219
    %s221 = scalar_lea.vmem [#allocation3], 8
    %v222 = vld [vmem:[%s221] sm:$0xff]
    %224 = vst [vmem:[#allocation1] ss:$4 sm:$0xff] %v222
    %v225 = vld.sshfl [vmem:[#allocation1] sm:$0xff pattern:$0x73625140]
    %v226 = vld.sshfl [vmem:[#allocation1 + $0x8] sm:$0xff pattern:$0x73625140]
    %v227 = vld.sshfl [vmem:[#allocation1 + $0x10] sm:$0xff pattern:$0x73625140]
    %v228 = vld.sshfl [vmem:[#allocation1 + $0x18] sm:$0xff pattern:$0x73625140]
    %233 = vmatpush.msra.mxu0 %v111
    %234 = vmatpush.msra.mxu0 %v107
    %235 = vmatpush.msra.mxu0 %v103
    %236 = vmatpush.msra.mxu0 %v99
    %237 = vmatpush.msra.mxu0 %v95
    %238 = vmatpush.msra.mxu0 %v91
    %239 = vmatpush.msra.mxu0 %v87
    %240 = vmatpush.msra.mxu0 %v83
    %241 = vmatpush.msra.mxu0 %v79
    %242 = vmatpush.msra.mxu0 %v75
    %243 = vmatpush.msra.mxu0 %v71
    %244 = vmatpush.msra.mxu0 %v67
    %245 = vmatpush.msra.mxu0 %v63
    %246 = vmatpush.msra.mxu0 %v59
    %247 = vmatpush.msra.mxu0 %v55
    %248 = vmatpush.msra.mxu0 %v51
    %249 = vmatmul.f32.gmra.mxu0 %v220
    %v250 = vpop.f32.mrf.mxu0
    %v251 = vadd.f32 %v225, %v250
    %252 = vdwg.mxu0
    %253 = vmatpush.msra.mxu0 %v112
    %254 = vmatpush.msra.mxu0 %v108
    %255 = vmatpush.msra.mxu0 %v104
    %256 = vmatpush.msra.mxu0 %v100
    %257 = vmatpush.msra.mxu0 %v96
    %258 = vmatpush.msra.mxu0 %v92
    %259 = vmatpush.msra.mxu0 %v88
    %260 = vmatpush.msra.mxu0 %v84
    %261 = vmatpush.msra.mxu0 %v80
    %262 = vmatpush.msra.mxu0 %v76
    %263 = vmatpush.msra.mxu0 %v72
    %264 = vmatpush.msra.mxu0 %v68
    %265 = vmatpush.msra.mxu0 %v64
    %266 = vmatpush.msra.mxu0 %v60
    %267 = vmatpush.msra.mxu0 %v56
    %268 = vmatpush.msra.mxu0 %v52
    %269 = vmatmul.f32.gmra.mxu0 %v220
    %v270 = vpop.f32.mrf.mxu0
    %v271 = vadd.f32 %v226, %v270
    %272 = vdwg.mxu0
    %273 = vmatpush.msra.mxu0 %v113
    %274 = vmatpush.msra.mxu0 %v109
    %275 = vmatpush.msra.mxu0 %v105
    %276 = vmatpush.msra.mxu0 %v101
    %277 = vmatpush.msra.mxu0 %v97
    %278 = vmatpush.msra.mxu0 %v93
    %279 = vmatpush.msra.mxu0 %v89
    %280 = vmatpush.msra.mxu0 %v85
    %281 = vmatpush.msra.mxu0 %v81
    %282 = vmatpush.msra.mxu0 %v77
    %283 = vmatpush.msra.mxu0 %v73
    %284 = vmatpush.msra.mxu0 %v69
    %285 = vmatpush.msra.mxu0 %v65
    %286 = vmatpush.msra.mxu0 %v61
    %287 = vmatpush.msra.mxu0 %v57
    %288 = vmatpush.msra.mxu0 %v53
    %289 = vmatmul.f32.gmra.mxu0 %v220
    %v290 = vpop.f32.mrf.mxu0
    %v291 = vadd.f32 %v227, %v290
    %292 = vdwg.mxu0
    %293 = vmatpush.msra.mxu0 %v114
    %294 = vmatpush.msra.mxu0 %v110
    %295 = vmatpush.msra.mxu0 %v106
    %296 = vmatpush.msra.mxu0 %v102
    %297 = vmatpush.msra.mxu0 %v98
    %298 = vmatpush.msra.mxu0 %v94
    %299 = vmatpush.msra.mxu0 %v90
    %300 = vmatpush.msra.mxu0 %v86
    %301 = vmatpush.msra.mxu0 %v82
    %302 = vmatpush.msra.mxu0 %v78
    %303 = vmatpush.msra.mxu0 %v74
    %304 = vmatpush.msra.mxu0 %v70
    %305 = vmatpush.msra.mxu0 %v66
    %306 = vmatpush.msra.mxu0 %v62
    %307 = vmatpush.msra.mxu0 %v58
    %308 = vmatpush.msra.mxu0 %v54
    %309 = vmatmul.f32.gmra.mxu0 %v220
    %v310 = vpop.f32.mrf.mxu0
    %v311 = vadd.f32 %v228, %v310
    %312 = vdwg.mxu0
    %v313 = vtanh.pop %v251
    %v314 = vtanh.pop %v271
    %v315 = vtanh.pop %v291
    %v316 = vtanh.pop %v311
    %v317 = vadd.f32 %v313, 1.0
    %v318 = vadd.f32 %v314, 1.0
    %v319 = vmul.f32 %v317, 0.5
    %v320 = vmul.f32 %v318, 0.5
    %v321 = vadd.f32 %v316, 1.0
    %v322 = vmul.f32 %v321, 0.5
    %v323 = vmul.f32 %v320, %v218
    %v324 = vmul.f32 %v319, %v315
    %v325 = vadd.f32 %v323, %v324
    %v326 = vtanh.pop %v325
    %v327 = vmul.f32 %v322, %v326
    %s328 = scalar_lea.vmem [#allocation3], 16
    %v329 = vld [vmem:[%s328] sm:$0xff]
    %331 = vst [vmem:[#allocation1] ss:$4 sm:$0xff] %v329
    %v332 = vld.sshfl [vmem:[#allocation1] sm:$0xff pattern:$0x73625140]
    %v333 = vld.sshfl [vmem:[#allocation1 + $0x8] sm:$0xff pattern:$0x73625140]
    %v334 = vld.sshfl [vmem:[#allocation1 + $0x10] sm:$0xff pattern:$0x73625140]
    %v335 = vld.sshfl [vmem:[#allocation1 + $0x18] sm:$0xff pattern:$0x73625140]
    %340 = vmatpush.msra.mxu0 %v111
    %341 = vmatpush.msra.mxu0 %v107
    %342 = vmatpush.msra.mxu0 %v103
    %343 = vmatpush.msra.mxu0 %v99
    %344 = vmatpush.msra.mxu0 %v95
    %345 = vmatpush.msra.mxu0 %v91
    %346 = vmatpush.msra.mxu0 %v87
    %347 = vmatpush.msra.mxu0 %v83
    %348 = vmatpush.msra.mxu0 %v79
    %349 = vmatpush.msra.mxu0 %v75
    %350 = vmatpush.msra.mxu0 %v71
    %351 = vmatpush.msra.mxu0 %v67
    %352 = vmatpush.msra.mxu0 %v63
    %353 = vmatpush.msra.mxu0 %v59
    %354 = vmatpush.msra.mxu0 %v55
    %355 = vmatpush.msra.mxu0 %v51
    %356 = vmatmul.f32.gmra.mxu0 %v327
    %v357 = vpop.f32.mrf.mxu0
    %v358 = vadd.f32 %v332, %v357
    %359 = vdwg.mxu0
    %360 = vmatpush.msra.mxu0 %v112
    %361 = vmatpush.msra.mxu0 %v108
    %362 = vmatpush.msra.mxu0 %v104
    %363 = vmatpush.msra.mxu0 %v100
    %364 = vmatpush.msra.mxu0 %v96
    %365 = vmatpush.msra.mxu0 %v92
    %366 = vmatpush.msra.mxu0 %v88
    %367 = vmatpush.msra.mxu0 %v84
    %368 = vmatpush.msra.mxu0 %v80
    %369 = vmatpush.msra.mxu0 %v76
    %370 = vmatpush.msra.mxu0 %v72
    %371 = vmatpush.msra.mxu0 %v68
    %372 = vmatpush.msra.mxu0 %v64
    %373 = vmatpush.msra.mxu0 %v60
    %374 = vmatpush.msra.mxu0 %v56
    %375 = vmatpush.msra.mxu0 %v52
    %376 = vmatmul.f32.gmra.mxu0 %v327
    %v377 = vpop.f32.mrf.mxu0
    %v378 = vadd.f32 %v333, %v377
    %379 = vdwg.mxu0
    %380 = vmatpush.msra.mxu0 %v113
    %381 = vmatpush.msra.mxu0 %v109
    %382 = vmatpush.msra.mxu0 %v105
    %383 = vmatpush.msra.mxu0 %v101
    %384 = vmatpush.msra.mxu0 %v97
    %385 = vmatpush.msra.mxu0 %v93
    %386 = vmatpush.msra.mxu0 %v89
    %387 = vmatpush.msra.mxu0 %v85
    %388 = vmatpush.msra.mxu0 %v81
    %389 = vmatpush.msra.mxu0 %v77
    %390 = vmatpush.msra.mxu0 %v73
    %391 = vmatpush.msra.mxu0 %v69
    %392 = vmatpush.msra.mxu0 %v65
    %393 = vmatpush.msra.mxu0 %v61
    %394 = vmatpush.msra.mxu0 %v57
    %395 = vmatpush.msra.mxu0 %v53
    %396 = vmatmul.f32.gmra.mxu0 %v327
    %v397 = vpop.f32.mrf.mxu0
    %v398 = vadd.f32 %v334, %v397
    %399 = vdwg.mxu0
    %400 = vmatpush.msra.mxu0 %v114
    %401 = vmatpush.msra.mxu0 %v110
    %402 = vmatpush.msra.mxu0 %v106
    %403 = vmatpush.msra.mxu0 %v102
    %404 = vmatpush.msra.mxu0 %v98
    %405 = vmatpush.msra.mxu0 %v94
    %406 = vmatpush.msra.mxu0 %v90
    %407 = vmatpush.msra.mxu0 %v86
    %408 = vmatpush.msra.mxu0 %v82
    %409 = vmatpush.msra.mxu0 %v78
    %410 = vmatpush.msra.mxu0 %v74
    %411 = vmatpush.msra.mxu0 %v70
    %412 = vmatpush.msra.mxu0 %v66
    %413 = vmatpush.msra.mxu0 %v62
    %414 = vmatpush.msra.mxu0 %v58
    %415 = vmatpush.msra.mxu0 %v54
    %416 = vmatmul.f32.gmra.mxu0 %v327
    %v417 = vpop.f32.mrf.mxu0
    %v418 = vadd.f32 %v335, %v417
    %419 = vdwg.mxu0
    %v420 = vtanh.pop %v358
    %v421 = vtanh.pop %v378
    %v422 = vtanh.pop %v398
    %v423 = vtanh.pop %v418
    %v424 = vadd.f32 %v420, 1.0
    %v425 = vadd.f32 %v421, 1.0
    %v426 = vmul.f32 %v424, 0.5
    %v427 = vmul.f32 %v425, 0.5
    %v428 = vadd.f32 %v423, 1.0
    %v429 = vmul.f32 %v428, 0.5
    %v430 = vmul.f32 %v427, %v325
    %v431 = vmul.f32 %v426, %v422
    %v432 = vadd.f32 %v430, %v431
    %v433 = vtanh.pop %v432
    %v434 = vmul.f32 %v429, %v433
    %s435 = scalar_lea.vmem [#allocation3], 24
    %v436 = vld [vmem:[%s435] sm:$0xff]
    %438 = vst [vmem:[#allocation1] ss:$4 sm:$0xff] %v436
    %v439 = vld.sshfl [vmem:[#allocation1] sm:$0xff pattern:$0x73625140]
    %v440 = vld.sshfl [vmem:[#allocation1 + $0x8] sm:$0xff pattern:$0x73625140]
    %v441 = vld.sshfl [vmem:[#allocation1 + $0x10] sm:$0xff pattern:$0x73625140]
    %v442 = vld.sshfl [vmem:[#allocation1 + $0x18] sm:$0xff pattern:$0x73625140]
    %447 = vmatpush.msra.mxu0 %v111
    %448 = vmatpush.msra.mxu0 %v107
    %449 = vmatpush.msra.mxu0 %v103
    %450 = vmatpush.msra.mxu0 %v99
    %451 = vmatpush.msra.mxu0 %v95
    %452 = vmatpush.msra.mxu0 %v91
    %453 = vmatpush.msra.mxu0 %v87
    %454 = vmatpush.msra.mxu0 %v83
    %455 = vmatpush.msra.mxu0 %v79
    %456 = vmatpush.msra.mxu0 %v75
    %457 = vmatpush.msra.mxu0 %v71
    %458 = vmatpush.msra.mxu0 %v67
    %459 = vmatpush.msra.mxu0 %v63
    %460 = vmatpush.msra.mxu0 %v59
    %461 = vmatpush.msra.mxu0 %v55
    %462 = vmatpush.msra.mxu0 %v51
    %463 = vmatmul.f32.gmra.mxu0 %v434
    %v464 = vpop.f32.mrf.mxu0
    %v465 = vadd.f32 %v439, %v464
    %466 = vdwg.mxu0
    %467 = vmatpush.msra.mxu0 %v112
    %468 = vmatpush.msra.mxu0 %v108
    %469 = vmatpush.msra.mxu0 %v104
    %470 = vmatpush.msra.mxu0 %v100
    %471 = vmatpush.msra.mxu0 %v96
    %472 = vmatpush.msra.mxu0 %v92
    %473 = vmatpush.msra.mxu0 %v88
    %474 = vmatpush.msra.mxu0 %v84
    %475 = vmatpush.msra.mxu0 %v80
    %476 = vmatpush.msra.mxu0 %v76
    %477 = vmatpush.msra.mxu0 %v72
    %478 = vmatpush.msra.mxu0 %v68
    %479 = vmatpush.msra.mxu0 %v64
    %480 = vmatpush.msra.mxu0 %v60
    %481 = vmatpush.msra.mxu0 %v56
    %482 = vmatpush.msra.mxu0 %v52
    %483 = vmatmul.f32.gmra.mxu0 %v434
    %v484 = vpop.f32.mrf.mxu0
    %v485 = vadd.f32 %v440, %v484
    %486 = vdwg.mxu0
    %487 = vmatpush.msra.mxu0 %v113
    %488 = vmatpush.msra.mxu0 %v109
    %489 = vmatpush.msra.mxu0 %v105
    %490 = vmatpush.msra.mxu0 %v101
    %491 = vmatpush.msra.mxu0 %v97
    %492 = vmatpush.msra.mxu0 %v93
    %493 = vmatpush.msra.mxu0 %v89
    %494 = vmatpush.msra.mxu0 %v85
    %495 = vmatpush.msra.mxu0 %v81
    %496 = vmatpush.msra.mxu0 %v77
    %497 = vmatpush.msra.mxu0 %v73
    %498 = vmatpush.msra.mxu0 %v69
    %499 = vmatpush.msra.mxu0 %v65
    %500 = vmatpush.msra.mxu0 %v61
    %501 = vmatpush.msra.mxu0 %v57
    %502 = vmatpush.msra.mxu0 %v53
    %503 = vmatmul.f32.gmra.mxu0 %v434
    %v504 = vpop.f32.mrf.mxu0
    %v505 = vadd.f32 %v441, %v504
    %506 = vdwg.mxu0
    %507 = vmatpush.msra.mxu0 %v114
    %508 = vmatpush.msra.mxu0 %v110
    %509 = vmatpush.msra.mxu0 %v106
    %510 = vmatpush.msra.mxu0 %v102
    %511 = vmatpush.msra.mxu0 %v98
    %512 = vmatpush.msra.mxu0 %v94
    %513 = vmatpush.msra.mxu0 %v90
    %514 = vmatpush.msra.mxu0 %v86
    %515 = vmatpush.msra.mxu0 %v82
    %516 = vmatpush.msra.mxu0 %v78
    %517 = vmatpush.msra.mxu0 %v74
    %518 = vmatpush.msra.mxu0 %v70
    %519 = vmatpush.msra.mxu0 %v66
    %520 = vmatpush.msra.mxu0 %v62
    %521 = vmatpush.msra.mxu0 %v58
    %522 = vmatpush.msra.mxu0 %v54
    %523 = vmatmul.f32.gmra.mxu0 %v434
    %v524 = vpop.f32.mrf.mxu0
    %v525 = vadd.f32 %v442, %v524
    %526 = vdwg.mxu0
    %v527 = vtanh.pop %v465
    %v528 = vtanh.pop %v485
    %v529 = vtanh.pop %v505
    %v530 = vtanh.pop %v525
    %v531 = vadd.f32 %v527, 1.0
    %v532 = vadd.f32 %v528, 1.0
    %v533 = vmul.f32 %v531, 0.5
    %v534 = vmul.f32 %v532, 0.5
    %v535 = vadd.f32 %v530, 1.0
    %v536 = vmul.f32 %v535, 0.5
    %v537 = vmul.f32 %v534, %v432
    %v538 = vmul.f32 %v533, %v529
    %v539 = vadd.f32 %v537, %v538
    %v540 = vtanh.pop %v539
    %v541 = vmul.f32 %v536, %v540
    %s542 = scalar_lea.vmem [#allocation3], 32
    %v543 = vld [vmem:[%s542] sm:$0xff]
    %545 = vst [vmem:[#allocation1] ss:$4 sm:$0xff] %v543
    %v546 = vld.sshfl [vmem:[#allocation1] sm:$0xff pattern:$0x73625140]
    %v547 = vld.sshfl [vmem:[#allocation1 + $0x8] sm:$0xff pattern:$0x73625140]
    %v548 = vld.sshfl [vmem:[#allocation1 + $0x10] sm:$0xff pattern:$0x73625140]
    %v549 = vld.sshfl [vmem:[#allocation1 + $0x18] sm:$0xff pattern:$0x73625140]
    %554 = vmatpush.msra.mxu0 %v111
    %555 = vmatpush.msra.mxu0 %v107
    %556 = vmatpush.msra.mxu0 %v103
    %557 = vmatpush.msra.mxu0 %v99
    %558 = vmatpush.msra.mxu0 %v95
    %559 = vmatpush.msra.mxu0 %v91
    %560 = vmatpush.msra.mxu0 %v87
    %561 = vmatpush.msra.mxu0 %v83
    %562 = vmatpush.msra.mxu0 %v79
    %563 = vmatpush.msra.mxu0 %v75
    %564 = vmatpush.msra.mxu0 %v71
    %565 = vmatpush.msra.mxu0 %v67
    %566 = vmatpush.msra.mxu0 %v63
    %567 = vmatpush.msra.mxu0 %v59
    %568 = vmatpush.msra.mxu0 %v55
    %569 = vmatpush.msra.mxu0 %v51
    %570 = vmatmul.f32.gmra.mxu0 %v541
    %v571 = vpop.f32.mrf.mxu0
    %v572 = vadd.f32 %v546, %v571
    %573 = vdwg.mxu0
    %574 = vmatpush.msra.mxu0 %v112
    %575 = vmatpush.msra.mxu0 %v108
    %576 = vmatpush.msra.mxu0 %v104
    %577 = vmatpush.msra.mxu0 %v100
    %578 = vmatpush.msra.mxu0 %v96
    %579 = vmatpush.msra.mxu0 %v92
    %580 = vmatpush.msra.mxu0 %v88
    %581 = vmatpush.msra.mxu0 %v84
    %582 = vmatpush.msra.mxu0 %v80
    %583 = vmatpush.msra.mxu0 %v76
    %584 = vmatpush.msra.mxu0 %v72
    %585 = vmatpush.msra.mxu0 %v68
    %586 = vmatpush.msra.mxu0 %v64
    %587 = vmatpush.msra.mxu0 %v60
    %588 = vmatpush.msra.mxu0 %v56
    %589 = vmatpush.msra.mxu0 %v52
    %590 = vmatmul.f32.gmra.mxu0 %v541
    %v591 = vpop.f32.mrf.mxu0
    %v592 = vadd.f32 %v547, %v591
    %593 = vdwg.mxu0
    %594 = vmatpush.msra.mxu0 %v113
    %595 = vmatpush.msra.mxu0 %v109
    %596 = vmatpush.msra.mxu0 %v105
    %597 = vmatpush.msra.mxu0 %v101
    %598 = vmatpush.msra.mxu0 %v97
    %599 = vmatpush.msra.mxu0 %v93
    %600 = vmatpush.msra.mxu0 %v89
    %601 = vmatpush.msra.mxu0 %v85
    %602 = vmatpush.msra.mxu0 %v81
    %603 = vmatpush.msra.mxu0 %v77
    %604 = vmatpush.msra.mxu0 %v73
    %605 = vmatpush.msra.mxu0 %v69
    %606 = vmatpush.msra.mxu0 %v65
    %607 = vmatpush.msra.mxu0 %v61
    %608 = vmatpush.msra.mxu0 %v57
    %609 = vmatpush.msra.mxu0 %v53
    %610 = vmatmul.f32.gmra.mxu0 %v541
    %v611 = vpop.f32.mrf.mxu0
    %v612 = vadd.f32 %v548, %v611
    %613 = vdwg.mxu0
    %614 = vmatpush.msra.mxu0 %v114
    %615 = vmatpush.msra.mxu0 %v110
    %616 = vmatpush.msra.mxu0 %v106
    %617 = vmatpush.msra.mxu0 %v102
    %618 = vmatpush.msra.mxu0 %v98
    %619 = vmatpush.msra.mxu0 %v94
    %620 = vmatpush.msra.mxu0 %v90
    %621 = vmatpush.msra.mxu0 %v86
    %622 = vmatpush.msra.mxu0 %v82
    %623 = vmatpush.msra.mxu0 %v78
    %624 = vmatpush.msra.mxu0 %v74
    %625 = vmatpush.msra.mxu0 %v70
    %626 = vmatpush.msra.mxu0 %v66
    %627 = vmatpush.msra.mxu0 %v62
    %628 = vmatpush.msra.mxu0 %v58
    %629 = vmatpush.msra.mxu0 %v54
    %630 = vmatmul.f32.gmra.mxu0 %v541
    %v631 = vpop.f32.mrf.mxu0
    %v632 = vadd.f32 %v549, %v631
    %633 = vdwg.mxu0
    %v634 = vtanh.pop %v572
    %v635 = vtanh.pop %v592
    %v636 = vtanh.pop %v612
    %v637 = vtanh.pop %v632
    %v638 = vadd.f32 %v634, 1.0
    %v639 = vadd.f32 %v635, 1.0
    %v640 = vmul.f32 %v638, 0.5
    %v641 = vmul.f32 %v639, 0.5
    %v642 = vadd.f32 %v637, 1.0
    %v643 = vmul.f32 %v642, 0.5
    %v644 = vmul.f32 %v641, %v539
    %v645 = vmul.f32 %v640, %v636
    %v646 = vadd.f32 %v644, %v645
    %v647 = vtanh.pop %v646
    %v648 = vmul.f32 %v643, %v647
    %s649 = scalar_lea.vmem [#allocation3], 40
    %v650 = vld [vmem:[%s649] sm:$0xff]
    %652 = vst [vmem:[#allocation1] ss:$4 sm:$0xff] %v650
    %v653 = vld.sshfl [vmem:[#allocation1] sm:$0xff pattern:$0x73625140]
    %v654 = vld.sshfl [vmem:[#allocation1 + $0x8] sm:$0xff pattern:$0x73625140]
    %v655 = vld.sshfl [vmem:[#allocation1 + $0x10] sm:$0xff pattern:$0x73625140]
    %v656 = vld.sshfl [vmem:[#allocation1 + $0x18] sm:$0xff pattern:$0x73625140]
    %661 = vmatpush.msra.mxu0 %v111
    %662 = vmatpush.msra.mxu0 %v107
    %663 = vmatpush.msra.mxu0 %v103
    %664 = vmatpush.msra.mxu0 %v99
    %665 = vmatpush.msra.mxu0 %v95
    %666 = vmatpush.msra.mxu0 %v91
    %667 = vmatpush.msra.mxu0 %v87
    %668 = vmatpush.msra.mxu0 %v83
    %669 = vmatpush.msra.mxu0 %v79
    %670 = vmatpush.msra.mxu0 %v75
    %671 = vmatpush.msra.mxu0 %v71
    %672 = vmatpush.msra.mxu0 %v67
    %673 = vmatpush.msra.mxu0 %v63
    %674 = vmatpush.msra.mxu0 %v59
    %675 = vmatpush.msra.mxu0 %v55
    %676 = vmatpush.msra.mxu0 %v51
    %677 = vmatmul.f32.gmra.mxu0 %v648
    %v678 = vpop.f32.mrf.mxu0
    %v679 = vadd.f32 %v653, %v678
    %680 = vdwg.mxu0
    %681 = vmatpush.msra.mxu0 %v112
    %682 = vmatpush.msra.mxu0 %v108
    %683 = vmatpush.msra.mxu0 %v104
    %684 = vmatpush.msra.mxu0 %v100
    %685 = vmatpush.msra.mxu0 %v96
    %686 = vmatpush.msra.mxu0 %v92
    %687 = vmatpush.msra.mxu0 %v88
    %688 = vmatpush.msra.mxu0 %v84
    %689 = vmatpush.msra.mxu0 %v80
    %690 = vmatpush.msra.mxu0 %v76
    %691 = vmatpush.msra.mxu0 %v72
    %692 = vmatpush.msra.mxu0 %v68
    %693 = vmatpush.msra.mxu0 %v64
    %694 = vmatpush.msra.mxu0 %v60
    %695 = vmatpush.msra.mxu0 %v56
    %696 = vmatpush.msra.mxu0 %v52
    %697 = vmatmul.f32.gmra.mxu0 %v648
    %v698 = vpop.f32.mrf.mxu0
    %v699 = vadd.f32 %v654, %v698
    %700 = vdwg.mxu0
    %701 = vmatpush.msra.mxu0 %v113
    %702 = vmatpush.msra.mxu0 %v109
    %703 = vmatpush.msra.mxu0 %v105
    %704 = vmatpush.msra.mxu0 %v101
    %705 = vmatpush.msra.mxu0 %v97
    %706 = vmatpush.msra.mxu0 %v93
    %707 = vmatpush.msra.mxu0 %v89
    %708 = vmatpush.msra.mxu0 %v85
    %709 = vmatpush.msra.mxu0 %v81
    %710 = vmatpush.msra.mxu0 %v77
    %711 = vmatpush.msra.mxu0 %v73
    %712 = vmatpush.msra.mxu0 %v69
    %713 = vmatpush.msra.mxu0 %v65
    %714 = vmatpush.msra.mxu0 %v61
    %715 = vmatpush.msra.mxu0 %v57
    %716 = vmatpush.msra.mxu0 %v53
    %717 = vmatmul.f32.gmra.mxu0 %v648
    %v718 = vpop.f32.mrf.mxu0
    %v719 = vadd.f32 %v655, %v718
    %720 = vdwg.mxu0
    %721 = vmatpush.msra.mxu0 %v114
    %722 = vmatpush.msra.mxu0 %v110
    %723 = vmatpush.msra.mxu0 %v106
    %724 = vmatpush.msra.mxu0 %v102
    %725 = vmatpush.msra.mxu0 %v98
    %726 = vmatpush.msra.mxu0 %v94
    %727 = vmatpush.msra.mxu0 %v90
    %728 = vmatpush.msra.mxu0 %v86
    %729 = vmatpush.msra.mxu0 %v82
    %730 = vmatpush.msra.mxu0 %v78
    %731 = vmatpush.msra.mxu0 %v74
    %732 = vmatpush.msra.mxu0 %v70
    %733 = vmatpush.msra.mxu0 %v66
    %734 = vmatpush.msra.mxu0 %v62
    %735 = vmatpush.msra.mxu0 %v58
    %736 = vmatpush.msra.mxu0 %v54
    %737 = vmatmul.f32.gmra.mxu0 %v648
    %v738 = vpop.f32.mrf.mxu0
    %v739 = vadd.f32 %v656, %v738
    %740 = vdwg.mxu0
    %v741 = vtanh.pop %v679
    %v742 = vtanh.pop %v699
    %v743 = vtanh.pop %v719
    %v744 = vtanh.pop %v739
    %v745 = vadd.f32 %v741, 1.0
    %v746 = vadd.f32 %v742, 1.0
    %v747 = vmul.f32 %v745, 0.5
    %v748 = vmul.f32 %v746, 0.5
    %v749 = vadd.f32 %v744, 1.0
    %v750 = vmul.f32 %v749, 0.5
    %v751 = vmul.f32 %v748, %v646
    %v752 = vmul.f32 %v747, %v743
    %v753 = vadd.f32 %v751, %v752
    %v754 = vtanh.pop %v753
    %v755 = vmul.f32 %v750, %v754
    %s756 = scalar_lea.vmem [#allocation3], 48
    %v757 = vld [vmem:[%s756] sm:$0xff]
    %759 = vst [vmem:[#allocation1] ss:$4 sm:$0xff] %v757
    %v760 = vld.sshfl [vmem:[#allocation1] sm:$0xff pattern:$0x73625140]
    %v761 = vld.sshfl [vmem:[#allocation1 + $0x8] sm:$0xff pattern:$0x73625140]
    %v762 = vld.sshfl [vmem:[#allocation1 + $0x10] sm:$0xff pattern:$0x73625140]
    %v763 = vld.sshfl [vmem:[#allocation1 + $0x18] sm:$0xff pattern:$0x73625140]
    %768 = vmatpush.msra.mxu0 %v111
    %769 = vmatpush.msra.mxu0 %v107
    %770 = vmatpush.msra.mxu0 %v103
    %771 = vmatpush.msra.mxu0 %v99
    %772 = vmatpush.msra.mxu0 %v95
    %773 = vmatpush.msra.mxu0 %v91
    %774 = vmatpush.msra.mxu0 %v87
    %775 = vmatpush.msra.mxu0 %v83
    %776 = vmatpush.msra.mxu0 %v79
    %777 = vmatpush.msra.mxu0 %v75
    %778 = vmatpush.msra.mxu0 %v71
    %779 = vmatpush.msra.mxu0 %v67
    %780 = vmatpush.msra.mxu0 %v63
    %781 = vmatpush.msra.mxu0 %v59
    %782 = vmatpush.msra.mxu0 %v55
    %783 = vmatpush.msra.mxu0 %v51
    %784 = vmatmul.f32.gmra.mxu0 %v755
    %v785 = vpop.f32.mrf.mxu0
    %v786 = vadd.f32 %v760, %v785
    %787 = vdwg.mxu0
    %788 = vmatpush.msra.mxu0 %v112
    %789 = vmatpush.msra.mxu0 %v108
    %790 = vmatpush.msra.mxu0 %v104
    %791 = vmatpush.msra.mxu0 %v100
    %792 = vmatpush.msra.mxu0 %v96
    %793 = vmatpush.msra.mxu0 %v92
    %794 = vmatpush.msra.mxu0 %v88
    %795 = vmatpush.msra.mxu0 %v84
    %796 = vmatpush.msra.mxu0 %v80
    %797 = vmatpush.msra.mxu0 %v76
    %798 = vmatpush.msra.mxu0 %v72
    %799 = vmatpush.msra.mxu0 %v68
    %800 = vmatpush.msra.mxu0 %v64
    %801 = vmatpush.msra.mxu0 %v60
    %802 = vmatpush.msra.mxu0 %v56
    %803 = vmatpush.msra.mxu0 %v52
    %804 = vmatmul.f32.gmra.mxu0 %v755
    %v805 = vpop.f32.mrf.mxu0
    %v806 = vadd.f32 %v761, %v805
    %807 = vdwg.mxu0
    %808 = vmatpush.msra.mxu0 %v113
    %809 = vmatpush.msra.mxu0 %v109
    %810 = vmatpush.msra.mxu0 %v105
    %811 = vmatpush.msra.mxu0 %v101
    %812 = vmatpush.msra.mxu0 %v97
    %813 = vmatpush.msra.mxu0 %v93
    %814 = vmatpush.msra.mxu0 %v89
    %815 = vmatpush.msra.mxu0 %v85
    %816 = vmatpush.msra.mxu0 %v81
    %817 = vmatpush.msra.mxu0 %v77
    %818 = vmatpush.msra.mxu0 %v73
    %819 = vmatpush.msra.mxu0 %v69
    %820 = vmatpush.msra.mxu0 %v65
    %821 = vmatpush.msra.mxu0 %v61
    %822 = vmatpush.msra.mxu0 %v57
    %823 = vmatpush.msra.mxu0 %v53
    %824 = vmatmul.f32.gmra.mxu0 %v755
    %v825 = vpop.f32.mrf.mxu0
    %v826 = vadd.f32 %v762, %v825
    %827 = vdwg.mxu0
    %828 = vmatpush.msra.mxu0 %v114
    %829 = vmatpush.msra.mxu0 %v110
    %830 = vmatpush.msra.mxu0 %v106
    %831 = vmatpush.msra.mxu0 %v102
    %832 = vmatpush.msra.mxu0 %v98
    %833 = vmatpush.msra.mxu0 %v94
    %834 = vmatpush.msra.mxu0 %v90
    %835 = vmatpush.msra.mxu0 %v86
    %836 = vmatpush.msra.mxu0 %v82
    %837 = vmatpush.msra.mxu0 %v78
    %838 = vmatpush.msra.mxu0 %v74
    %839 = vmatpush.msra.mxu0 %v70
    %840 = vmatpush.msra.mxu0 %v66
    %841 = vmatpush.msra.mxu0 %v62
    %842 = vmatpush.msra.mxu0 %v58
    %843 = vmatpush.msra.mxu0 %v54
    %844 = vmatmul.f32.gmra.mxu0 %v755
    %v845 = vpop.f32.mrf.mxu0
    %v846 = vadd.f32 %v763, %v845
    %847 = vdwg.mxu0
    %v848 = vtanh.pop %v786
    %v849 = vtanh.pop %v806
    %v850 = vtanh.pop %v826
    %v851 = vtanh.pop %v846
    %v852 = vadd.f32 %v848, 1.0
    %v853 = vadd.f32 %v849, 1.0
    %v854 = vmul.f32 %v852, 0.5
    %v855 = vmul.f32 %v853, 0.5
    %v856 = vadd.f32 %v851, 1.0
    %v857 = vmul.f32 %v856, 0.5
    %v858 = vmul.f32 %v855, %v753
    %v859 = vmul.f32 %v854, %v850
    %v860 = vadd.f32 %v858, %v859
    %v861 = vtanh.pop %v860
    %v862 = vmul.f32 %v857, %v861
    %s863 = scalar_lea.vmem [#allocation3], 56
    %v864 = vld [vmem:[%s863] sm:$0xff]
    %866 = vst [vmem:[#allocation1] ss:$4 sm:$0xff] %v864
    %v867 = vld.sshfl [vmem:[#allocation1] sm:$0xff pattern:$0x73625140]
    %v868 = vld.sshfl [vmem:[#allocation1 + $0x8] sm:$0xff pattern:$0x73625140]
    %v869 = vld.sshfl [vmem:[#allocation1 + $0x10] sm:$0xff pattern:$0x73625140]
    %v870 = vld.sshfl [vmem:[#allocation1 + $0x18] sm:$0xff pattern:$0x73625140]
    %875 = vmatpush.msra.mxu0 %v111
    %876 = vmatpush.msra.mxu0 %v107
    %877 = vmatpush.msra.mxu0 %v103
    %878 = vmatpush.msra.mxu0 %v99
    %879 = vmatpush.msra.mxu0 %v95
    %880 = vmatpush.msra.mxu0 %v91
    %881 = vmatpush.msra.mxu0 %v87
    %882 = vmatpush.msra.mxu0 %v83
    %883 = vmatpush.msra.mxu0 %v79
    %884 = vmatpush.msra.mxu0 %v75
    %885 = vmatpush.msra.mxu0 %v71
    %886 = vmatpush.msra.mxu0 %v67
    %887 = vmatpush.msra.mxu0 %v63
    %888 = vmatpush.msra.mxu0 %v59
    %889 = vmatpush.msra.mxu0 %v55
    %890 = vmatpush.msra.mxu0 %v51
    %891 = vmatmul.f32.gmra.mxu0 %v862
    %v892 = vpop.f32.mrf.mxu0
    %v893 = vadd.f32 %v867, %v892
    %894 = vdwg.mxu0
    %895 = vmatpush.msra.mxu0 %v112
    %896 = vmatpush.msra.mxu0 %v108
    %897 = vmatpush.msra.mxu0 %v104
    %898 = vmatpush.msra.mxu0 %v100
    %899 = vmatpush.msra.mxu0 %v96
    %900 = vmatpush.msra.mxu0 %v92
    %901 = vmatpush.msra.mxu0 %v88
    %902 = vmatpush.msra.mxu0 %v84
    %903 = vmatpush.msra.mxu0 %v80
    %904 = vmatpush.msra.mxu0 %v76
    %905 = vmatpush.msra.mxu0 %v72
    %906 = vmatpush.msra.mxu0 %v68
    %907 = vmatpush.msra.mxu0 %v64
    %908 = vmatpush.msra.mxu0 %v60
    %909 = vmatpush.msra.mxu0 %v56
    %910 = vmatpush.msra.mxu0 %v52
    %911 = vmatmul.f32.gmra.mxu0 %v862
    %v912 = vpop.f32.mrf.mxu0
    %v913 = vadd.f32 %v868, %v912
    %914 = vdwg.mxu0
    %915 = vmatpush.msra.mxu0 %v113
    %916 = vmatpush.msra.mxu0 %v109
    %917 = vmatpush.msra.mxu0 %v105
    %918 = vmatpush.msra.mxu0 %v101
    %919 = vmatpush.msra.mxu0 %v97
    %920 = vmatpush.msra.mxu0 %v93
    %921 = vmatpush.msra.mxu0 %v89
    %922 = vmatpush.msra.mxu0 %v85
    %923 = vmatpush.msra.mxu0 %v81
    %924 = vmatpush.msra.mxu0 %v77
    %925 = vmatpush.msra.mxu0 %v73
    %926 = vmatpush.msra.mxu0 %v69
    %927 = vmatpush.msra.mxu0 %v65
    %928 = vmatpush.msra.mxu0 %v61
    %929 = vmatpush.msra.mxu0 %v57
    %930 = vmatpush.msra.mxu0 %v53
    %931 = vmatmul.f32.gmra.mxu0 %v862
    %v932 = vpop.f32.mrf.mxu0
    %v933 = vadd.f32 %v869, %v932
    %934 = vdwg.mxu0
    %935 = vmatpush.msra.mxu0 %v114
    %936 = vmatpush.msra.mxu0 %v110
    %937 = vmatpush.msra.mxu0 %v106
    %938 = vmatpush.msra.mxu0 %v102
    %939 = vmatpush.msra.mxu0 %v98
    %940 = vmatpush.msra.mxu0 %v94
    %941 = vmatpush.msra.mxu0 %v90
    %942 = vmatpush.msra.mxu0 %v86
    %943 = vmatpush.msra.mxu0 %v82
    %944 = vmatpush.msra.mxu0 %v78
    %945 = vmatpush.msra.mxu0 %v74
    %946 = vmatpush.msra.mxu0 %v70
    %947 = vmatpush.msra.mxu0 %v66
    %948 = vmatpush.msra.mxu0 %v62
    %949 = vmatpush.msra.mxu0 %v58
    %950 = vmatpush.msra.mxu0 %v54
    %951 = vmatmul.f32.gmra.mxu0 %v862
    %v952 = vpop.f32.mrf.mxu0
    %v953 = vadd.f32 %v870, %v952
    %954 = vdwg.mxu0
    %v955 = vtanh.pop %v893
    %v956 = vtanh.pop %v913
    %v957 = vtanh.pop %v933
    %v958 = vtanh.pop %v953
    %v959 = vadd.f32 %v955, 1.0
    %v960 = vadd.f32 %v956, 1.0
    %v961 = vmul.f32 %v959, 0.5
    %v962 = vmul.f32 %v960, 0.5
    %v963 = vadd.f32 %v958, 1.0
    %v964 = vmul.f32 %v963, 0.5
    %v965 = vmul.f32 %v962, %v860
    %v966 = vmul.f32 %v961, %v957
    %v967 = vadd.f32 %v965, %v966
    %v968 = vtanh.pop %v967
    %v969 = vmul.f32 %v964, %v968
    %s970 = scalar_lea.vmem [#allocation3], 64
    %v971 = vld [vmem:[%s970] sm:$0xff]
    %973 = vst [vmem:[#allocation1] ss:$4 sm:$0xff] %v971
    %v974 = vld.sshfl [vmem:[#allocation1] sm:$0xff pattern:$0x73625140]
    %v975 = vld.sshfl [vmem:[#allocation1 + $0x8] sm:$0xff pattern:$0x73625140]
    %v976 = vld.sshfl [vmem:[#allocation1 + $0x10] sm:$0xff pattern:$0x73625140]
    %v977 = vld.sshfl [vmem:[#allocation1 + $0x18] sm:$0xff pattern:$0x73625140]
    %982 = vmatpush.msra.mxu0 %v111
    %983 = vmatpush.msra.mxu0 %v107
    %984 = vmatpush.msra.mxu0 %v103
    %985 = vmatpush.msra.mxu0 %v99
    %986 = vmatpush.msra.mxu0 %v95
    %987 = vmatpush.msra.mxu0 %v91
    %988 = vmatpush.msra.mxu0 %v87
    %989 = vmatpush.msra.mxu0 %v83
    %990 = vmatpush.msra.mxu0 %v79
    %991 = vmatpush.msra.mxu0 %v75
    %992 = vmatpush.msra.mxu0 %v71
    %993 = vmatpush.msra.mxu0 %v67
    %994 = vmatpush.msra.mxu0 %v63
    %995 = vmatpush.msra.mxu0 %v59
    %996 = vmatpush.msra.mxu0 %v55
    %997 = vmatpush.msra.mxu0 %v51
    %998 = vmatmul.f32.gmra.mxu0 %v969
    %v999 = vpop.f32.mrf.mxu0
    %v1000 = vadd.f32 %v974, %v999
    %1001 = vdwg.mxu0
    %1002 = vmatpush.msra.mxu0 %v112
    %1003 = vmatpush.msra.mxu0 %v108
    %1004 = vmatpush.msra.mxu0 %v104
    %1005 = vmatpush.msra.mxu0 %v100
    %1006 = vmatpush.msra.mxu0 %v96
    %1007 = vmatpush.msra.mxu0 %v92
    %1008 = vmatpush.msra.mxu0 %v88
    %1009 = vmatpush.msra.mxu0 %v84
    %1010 = vmatpush.msra.mxu0 %v80
    %1011 = vmatpush.msra.mxu0 %v76
    %1012 = vmatpush.msra.mxu0 %v72
    %1013 = vmatpush.msra.mxu0 %v68
    %1014 = vmatpush.msra.mxu0 %v64
    %1015 = vmatpush.msra.mxu0 %v60
    %1016 = vmatpush.msra.mxu0 %v56
    %1017 = vmatpush.msra.mxu0 %v52
    %1018 = vmatmul.f32.gmra.mxu0 %v969
    %v1019 = vpop.f32.mrf.mxu0
    %v1020 = vadd.f32 %v975, %v1019
    %1021 = vdwg.mxu0
    %1022 = vmatpush.msra.mxu0 %v113
    %1023 = vmatpush.msra.mxu0 %v109
    %1024 = vmatpush.msra.mxu0 %v105
    %1025 = vmatpush.msra.mxu0 %v101
    %1026 = vmatpush.msra.mxu0 %v97
    %1027 = vmatpush.msra.mxu0 %v93
    %1028 = vmatpush.msra.mxu0 %v89
    %1029 = vmatpush.msra.mxu0 %v85
    %1030 = vmatpush.msra.mxu0 %v81
    %1031 = vmatpush.msra.mxu0 %v77
    %1032 = vmatpush.msra.mxu0 %v73
    %1033 = vmatpush.msra.mxu0 %v69
    %1034 = vmatpush.msra.mxu0 %v65
    %1035 = vmatpush.msra.mxu0 %v61
    %1036 = vmatpush.msra.mxu0 %v57
    %1037 = vmatpush.msra.mxu0 %v53
    %1038 = vmatmul.f32.gmra.mxu0 %v969
    %v1039 = vpop.f32.mrf.mxu0
    %v1040 = vadd.f32 %v976, %v1039
    %1041 = vdwg.mxu0
    %1042 = vmatpush.msra.mxu0 %v114
    %1043 = vmatpush.msra.mxu0 %v110
    %1044 = vmatpush.msra.mxu0 %v106
    %1045 = vmatpush.msra.mxu0 %v102
    %1046 = vmatpush.msra.mxu0 %v98
    %1047 = vmatpush.msra.mxu0 %v94
    %1048 = vmatpush.msra.mxu0 %v90
    %1049 = vmatpush.msra.mxu0 %v86
    %1050 = vmatpush.msra.mxu0 %v82
    %1051 = vmatpush.msra.mxu0 %v78
    %1052 = vmatpush.msra.mxu0 %v74
    %1053 = vmatpush.msra.mxu0 %v70
    %1054 = vmatpush.msra.mxu0 %v66
    %1055 = vmatpush.msra.mxu0 %v62
    %1056 = vmatpush.msra.mxu0 %v58
    %1057 = vmatpush.msra.mxu0 %v54
    %1058 = vmatmul.f32.gmra.mxu0 %v969
    %v1059 = vpop.f32.mrf.mxu0
    %v1060 = vadd.f32 %v977, %v1059
    %1061 = vdwg.mxu0
    %v1062 = vtanh.pop %v1000
    %v1063 = vtanh.pop %v1020
    %v1064 = vtanh.pop %v1040
    %v1065 = vtanh.pop %v1060
    %v1066 = vadd.f32 %v1062, 1.0
    %v1067 = vadd.f32 %v1063, 1.0
    %v1068 = vmul.f32 %v1066, 0.5
    %v1069 = vmul.f32 %v1067, 0.5
    %v1070 = vadd.f32 %v1065, 1.0
    %v1071 = vmul.f32 %v1070, 0.5
    %v1072 = vmul.f32 %v1069, %v967
    %v1073 = vmul.f32 %v1068, %v1064
    %v1074 = vadd.f32 %v1072, %v1073
    %v1075 = vtanh.pop %v1074
    %v1076 = vmul.f32 %v1071, %v1075
    %v1077 = vld [vmem:[%s2] sm:$0x1]
    %v1079 = vperm.slane %v1077, 0
    %1080 = vrot.lane.b32.xlu0 %v1079, 64
    %v1081 = vpop.permute.xlu0 %1080
    %v1083 = vmul.f32 %v1076, %v1081
    %1085 = vrot.lane.b32.xlu0 %v1083, 64
    %v1086 = vpop.permute.xlu0 %1085
    %vm1088 = vcmask 517120
    %v1089 = vsel %vm1088, %v1086, 0.0
    %1090 = vadd.xlane.f32.xlu0 %v1089
    %v1091 = vpop.xlane.xlu0 %1090
    %v1092 = vld [vmem:[#allocation2] sm:$0x1]
    %v1094 = vperm.slane %v1092, 0
    %v1096 = vadd.f32 %v1091, %v1094
    %vm1097 = vcmask 1024
    %1098 = vst.msk [vmem:[%s4] sm:$0x3] %vm1097, %v1096
    // Predicated region
    $region26: #{tpu_custom_call.1} parent=1 // pred_check
      _
    $region27: #{tpu_custom_call.1} parent=1 // pred_check_branch
      %1100 = sbr.rel (0) target = $region29
    $region28: #{tpu_custom_call.1} parent=1 // pred_region
      _
    $region29: #{tpu_custom_call.1} parent=1 // pred_fallthru
      _
    // Predicated region
    $region30: #{tpu_custom_call.1} parent=1 // pred_check
      _
    $region31: #{tpu_custom_call.1} parent=1 // pred_check_branch
      %1102 = sbr.rel (0) target = $region33
    $region32: #{tpu_custom_call.1} parent=1 // pred_region
      _
    $region33: #{tpu_custom_call.1} parent=1 // pred_fallthru
      _
    %1103 = vsyncpa [#allocation4], 1
    %1104 = vsyncpa [#allocation6], 1

</llo_original>
